<compile_context>
chip_gen: v5e
topology: v5e:2x2
jax: 0.10.0
libtpu: 0.0.40
codegen_flags: <defaults>
</compile_context>

<pallas_src>
import math
import functools

import jax
import jax.numpy as jnp
from jax import lax
from jax.experimental import pallas as pl
from jax.experimental.pallas import tpu as pltpu


def _round_up(x, m):
    return ((x + m - 1) // m) * m


def _attention_kernel(x_ref, adj_ref, diag_ref, w_ref, b_ref,
                      v_out_ref, a_out_ref, a_acc_ref,
                      *, num_heads, ds_p, out_dim_p):
    x = x_ref[...]          # (Bt, N, in_dim)
    adj = adj_ref[...]      # (Bt, N, N)
    diag = diag_ref[...]    # (Bt, N, 1)  == diag(adj) per batch
    Bt, N, in_dim = x.shape
    F = w_ref.shape[1]

    # --- fused GCN projection for [V | Q | K] -------------------------------
    if N % 8 == 0:
        # One big (Bt*N, in_dim) @ (in_dim, F) matmul (fills the MXU M-dim).
        xw = jnp.dot(x.reshape(Bt * N, in_dim), w_ref[...],
                     preferred_element_type=jnp.float32).reshape(Bt, N, F)
    else:
        xw = jnp.einsum('bni,if->bnf', x, w_ref[...],
                        preferred_element_type=jnp.float32)

    # Self-loop folded algebraically (no adj_loop / iota materialization):
    #   adj_loop      = adj with its diagonal set to 1
    #   deg           = sum(adj, -1) - diag(adj) + 1
    #   adj_loop @ y  = adj @ y + (1 - diag(adj)) * y
    deg = jnp.sum(adj, axis=-1, keepdims=True) - diag + 1.0
    d = lax.rsqrt(jnp.maximum(deg, 1.0))                     # (Bt, N, 1)

    y = xw * d
    agg = jnp.einsum('bij,bjf->bif', adj, y,
                     preferred_element_type=jnp.float32) + (1.0 - diag) * y
    qkv = agg * d + b_ref[...]                               # (Bt, N, F)

    # V: lane-dense, 128-aligned full-width store (sliced back outside).
    v_out_ref[...] = qkv[:, :, :out_dim_p].astype(v_out_ref.dtype)

    # --- multi-head tanh attention ------------------------------------------
    # Every per-head segment starts/ends on a 128-lane boundary -> free views.
    # The 1/sqrt(out_dim) scale is already folded into the Q weights.
    # K^T is folded into the dot_general contraction (no explicit transpose).
    q_base = out_dim_p
    k_base = out_dim_p + num_heads * ds_p
    for h in range(num_heads):
        Qh = qkv[:, :, q_base + h * ds_p:q_base + (h + 1) * ds_p]
        Kh = qkv[:, :, k_base + h * ds_p:k_base + (h + 1) * ds_p]
        s = lax.dot_general(Qh, Kh,
                            dimension_numbers=(((2,), (2,)), ((0,), (0,))),
                            preferred_element_type=jnp.float32)   # (Bt, N, N)
        t = jnp.tanh(s)
        if h == 0:
            a_acc_ref[...] = t
        else:
            a_acc_ref[...] += t

    # Head-mean + symmetrization with a single fused constant (2D transposes).
    c = 0.5 / num_heads
    for b in range(Bt):
        ab = a_acc_ref[b]                                    # (N, N)
        a_out_ref[b] = ((ab + ab.T) * c).astype(a_out_ref.dtype)


def attention_forward(x, adj, params, *, num_heads):
    """x: (B, N, in_dim) f32; adj: (B, N, N) f32. Returns (V, A)."""
    B, N, in_dim = x.shape
    wq, bq, wk, bk, wv, bv = params
    attn_dim = wq.shape[1]
    out_dim = wv.shape[1]
    assert attn_dim % num_heads == 0

    ds = attn_dim // num_heads
    ds_p = _round_up(ds, 128)            # per-head segment, lane aligned
    out_dim_p = _round_up(out_dim, 128)  # V segment, lane aligned
    F = out_dim_p + 2 * num_heads * ds_p

    # Fold the 1/sqrt(out_dim) score scale into Wq/bq (GCN is linear in W, b).
    scale = 1.0 / math.sqrt(out_dim)

    def pad_heads(w, b, s):
        w = (w * s).reshape(in_dim, num_heads, ds)
        w = jnp.pad(w, ((0, 0), (0, 0), (0, ds_p - ds)))
        b = (b * s).reshape(1, num_heads, ds)
        b = jnp.pad(b, ((0, 0), (0, 0), (0, ds_p - ds)))
        return (w.reshape(in_dim, num_heads * ds_p),
                b.reshape(1, num_heads * ds_p))

    wq_p, bq_p = pad_heads(wq, bq, scale)
    wk_p, bk_p = pad_heads(wk, bk, 1.0)
    wv_p = jnp.pad(wv, ((0, 0), (0, out_dim_p - out_dim)))
    bv_p = jnp.pad(bv, ((0, 0), (0, out_dim_p - out_dim)))

    # Fused, fully lane-aligned layout: [ V_pad | Q heads (padded) | K heads ].
    w_fused = jnp.concatenate([wv_p, wq_p, wk_p], axis=1)    # (in_dim, F)
    b_fused = jnp.concatenate([bv_p, bq_p, bk_p], axis=1)    # (1, F)

    # diag(adj): O(B*N) extraction outside the kernel; avoids per-step iota /
    # adj_loop temporaries and is megacore-safe (no persistent-scratch init).
    diag = jnp.diagonal(adj, axis1=-2, axis2=-1)[..., None]  # (B, N, 1)

    # Generation-aware VMEM budget (~51 MiB on v7x, ~102 MiB on v5e/v6e).
    try:
        vmem_limit = int(pltpu.get_tpu_info().vmem_capacity_bytes * 0.8)
    except Exception:
        vmem_limit = 64 * 1024 * 1024

    # Pack several small graphs per grid step (fills MXU M-dim, amortizes the
    # per-step overhead, feeds both v7x TensorCores).  Bt must divide B and
    # keep the pipelined blocks + temps within a conservative VMEM budget.
    per_b = 4 * (2 * (N * in_dim + 2 * N * N + N * out_dim_p)   # 2x-buffered blocks
                 + 4 * N * F + N * N)                            # in-kernel temps
    Bt = 1
    for cand in range(min(B, 8), 0, -1):
        if B % cand == 0 and cand * per_b <= vmem_limit // 2:
            Bt = cand
            break

    kernel = functools.partial(_attention_kernel, num_heads=num_heads,
                               ds_p=ds_p, out_dim_p=out_dim_p)

    v_pad, a_out = pl.pallas_call(
        kernel,
        out_shape=(
            jax.ShapeDtypeStruct((B, N, out_dim_p), jnp.float32),  # padded V
            jax.ShapeDtypeStruct((B, N, N), jnp.float32),          # A
        ),
        grid_spec=pltpu.PrefetchScalarGridSpec(
            num_scalar_prefetch=0,
            grid=(B // Bt,),
            in_specs=[
                pl.BlockSpec((Bt, N, in_dim), lambda b: (b, 0, 0)),   # x
                pl.BlockSpec((Bt, N, N), lambda b: (b, 0, 0)),        # adj
                pl.BlockSpec((Bt, N, 1), lambda b: (b, 0, 0)),        # diag(adj)
                pl.BlockSpec((in_dim, F), lambda b: (0, 0)),          # W fused
                pl.BlockSpec((1, F), lambda b: (0, 0)),               # b fused
            ],
            out_specs=[
                pl.BlockSpec((Bt, N, out_dim_p), lambda b: (b, 0, 0)),
                pl.BlockSpec((Bt, N, N), lambda b: (b, 0, 0)),
            ],
            scratch_shapes=[pltpu.VMEM((Bt, N, N), jnp.float32)],     # score acc
        ),
        compiler_params=pltpu.CompilerParams(
            dimension_semantics=("parallel",),
            vmem_limit_bytes=vmem_limit),
    )(x, adj, diag, w_fused, b_fused)

    return v_pad[..., :out_dim], a_out


def glorot(key, in_f, out_f):
    stdv = math.sqrt(6.0 / (in_f + out_f))
    return jax.random.uniform(key, (in_f, out_f), jnp.float32, -stdv, stdv)


def reference_forward(x, adj, params, *, num_heads):
    """Pure-JAX replica of the PyTorch forward for verification."""
    wq, bq, wk, bk, wv, bv = params
    B, N, _ = adj.shape
    out_dim = wv.shape[1]
    eye = jnp.eye(N, dtype=adj.dtype)
    adj_l = adj * (1 - eye) + eye
    deg = jnp.maximum(adj_l.sum(-1), 1.0)          # clamp(min=1)
    d = deg ** -0.5
    adj_n = d[:, :, None] * adj_l * d[:, None, :]

    def gcn(w, b):
        return jnp.einsum('bij,bjf->bif', adj_n,
                          jnp.einsum('bni,io->bno', x, w)) + b.reshape(1, 1, -1)

    Q, K, V = gcn(wq, bq), gcn(wk, bk), gcn(wv, bv)
    Q_ = jnp.concatenate(jnp.split(Q, num_heads, axis=-1), axis=0)
    K_ = jnp.concatenate(jnp.split(K, num_heads, axis=-1), axis=0)
    A = jnp.tanh(jnp.einsum('bnd,bmd->bnm', Q_, K_) / math.sqrt(out_dim))
    A = A.reshape(num_heads, B, N, N).mean(axis=0)
    A = (A + jnp.swapaxes(A, -1, -2)) / 2
    return V, A


if __name__ == "__main__":
    B, N = 2, 16
    in_dim, attn_dim, out_dim, num_heads = 8, 16, 8, 4

    key = jax.random.PRNGKey(0)
    kx, ka, kq, kk, kv = jax.random.split(key, 5)

    x = jax.random.normal(kx, (B, N, in_dim), jnp.float32)
    adj = (jax.random.uniform(ka, (B, N, N)) > 0.5).astype(jnp.float32)
    adj = (adj + jnp.swapaxes(adj, -1, -2)) / 2  # symmetric-ish adjacency

    params = (
        glorot(kq, in_dim, attn_dim), jnp.zeros((1, attn_dim), jnp.float32),
        glorot(kk, in_dim, attn_dim), jnp.zeros((1, attn_dim), jnp.float32),
        glorot(kv, in_dim, out_dim), jnp.zeros((1, out_dim), jnp.float32),
    )

    V, A = attention_forward(x, adj, params, num_heads=num_heads)
    V, A = jax.block_until_ready((V, A))

    V_ref, A_ref = reference_forward(x, adj, params, num_heads=num_heads)
    assert jnp.allclose(V, V_ref, atol=1e-4, rtol=1e-4), "V mismatch"
    assert jnp.allclose(A, A_ref, atol=1e-4, rtol=1e-4), "A mismatch"

    print("KERNEL_OK")
</pallas_src>

<mosaic_0001>
module attributes {stable_mosaic.version = 11 : i64} {
  func.func @_attention_kernel(%arg0: i32, %arg1: memref<2x16x8xf32, #tpu.memory_space<vmem>>, %arg2: memref<2x16x16xf32, #tpu.memory_space<vmem>>, %arg3: memref<2x16x1xf32, #tpu.memory_space<vmem>>, %arg4: memref<8x1152xf32, #tpu.memory_space<vmem>>, %arg5: memref<1x1152xf32, #tpu.memory_space<vmem>>, %arg6: memref<2x16x128xf32, #tpu.memory_space<vmem>>, %arg7: memref<2x16x16xf32, #tpu.memory_space<vmem>>, %arg8: memref<2x16x16xf32, #tpu.memory_space<vmem>>) attributes {dimension_semantics = [#tpu.dimension_semantics<parallel>], iteration_bounds = array<i64: 1>, scalar_prefetch = 0 : i64, scratch_operands = 1 : i64, tpu.core_type = #tpu.core_type<tc>, window_params = [{transform_indices = @transform_0, window_bounds = array<i64: 2, 16, 8>}, {transform_indices = @transform_1, window_bounds = array<i64: 2, 16, 16>}, {transform_indices = @transform_2, window_bounds = array<i64: 2, 16, 1>}, {pipeline_mode = #tpu.pipeline_mode<synchronous>, transform_indices = @transform_3, window_bounds = array<i64: 8, 1152>}, {pipeline_mode = #tpu.pipeline_mode<synchronous>, transform_indices = @transform_4, window_bounds = array<i64: 1, 1152>}, {transform_indices = @transform_5, window_bounds = array<i64: 2, 16, 128>}, {transform_indices = @transform_6, window_bounds = array<i64: 2, 16, 16>}]} {
    %c0 = arith.constant 0 : index
    %c0_0 = arith.constant 0 : index
    %c0_1 = arith.constant 0 : index
    %0 = vector.load %arg1[%c0, %c0_0, %c0_1] : memref<2x16x8xf32, #tpu.memory_space<vmem>>, vector<2x16x8xf32>
    %c0_2 = arith.constant 0 : index
    %c0_3 = arith.constant 0 : index
    %c0_4 = arith.constant 0 : index
    %1 = vector.load %arg2[%c0_2, %c0_3, %c0_4] : memref<2x16x16xf32, #tpu.memory_space<vmem>>, vector<2x16x16xf32>
    %c0_5 = arith.constant 0 : index
    %c0_6 = arith.constant 0 : index
    %c0_7 = arith.constant 0 : index
    %2 = vector.load %arg3[%c0_5, %c0_6, %c0_7] : memref<2x16x1xf32, #tpu.memory_space<vmem>>, vector<2x16x1xf32>
    %3 = vector.shape_cast %0 : vector<2x16x8xf32> to vector<32x8xf32>
    %c0_8 = arith.constant 0 : index
    %c0_9 = arith.constant 0 : index
    %4 = vector.load %arg4[%c0_8, %c0_9] : memref<8x1152xf32, #tpu.memory_space<vmem>>, vector<8x1152xf32>
    %cst = arith.constant dense<0.000000e+00> : vector<32x1152xf32>
    %5 = tpu.matmul %3, %4, %cst {dimension_numbers = #tpu.dot_dimension_numbers<[1], [0], [0], [1], [0, 0, 1, 1], [], []>} : vector<32x8xf32>, vector<8x1152xf32>, vector<32x1152xf32> -> vector<32x1152xf32>
    %6 = vector.shape_cast %5 : vector<32x1152xf32> to vector<2x16x1152xf32>
    %cst_10 = arith.constant dense<0.000000e+00> : vector<2x16xf32>
    %7 = vector.multi_reduction <add>, %1, %cst_10 [2] : vector<2x16x16xf32> to vector<2x16xf32>
    %8 = vector.shape_cast %7 : vector<2x16xf32> to vector<2x16x1xf32>
    %9 = arith.subf %8, %2 : vector<2x16x1xf32>
    %cst_11 = arith.constant 1.000000e+00 : f32
    %10 = vector.broadcast %cst_11 : f32 to vector<2x16x1xf32>
    %11 = arith.addf %9, %10 : vector<2x16x1xf32>
    %cst_12 = arith.constant 1.000000e+00 : f32
    %12 = vector.broadcast %cst_12 : f32 to vector<2x16x1xf32>
    %13 = arith.maximumf %11, %12 : vector<2x16x1xf32>
    %14 = math.rsqrt %13 : vector<2x16x1xf32>
    %15 = vector.broadcast %14 : vector<2x16x1xf32> to vector<2x16x1152xf32>
    %16 = arith.mulf %6, %15 : vector<2x16x1152xf32>
    "tpu.trace_start"() <{level = 10 : i32, message = "bij,bjf->bif"}> : () -> ()
    %cst_13 = arith.constant dense<0.000000e+00> : vector<2x16x1152xf32>
    %17 = tpu.matmul %1, %16, %cst_13 {dimension_numbers = #tpu.dot_dimension_numbers<[2], [1], [1], [2], [0, 0, 0, 1, 1, 2], [0], [0]>} : vector<2x16x16xf32>, vector<2x16x1152xf32>, vector<2x16x1152xf32> -> vector<2x16x1152xf32>
    "tpu.trace_stop"() : () -> ()
    %cst_14 = arith.constant 1.000000e+00 : f32
    %18 = vector.broadcast %cst_14 : f32 to vector<2x16x1xf32>
    %19 = arith.subf %18, %2 : vector<2x16x1xf32>
    %20 = vector.broadcast %19 : vector<2x16x1xf32> to vector<2x16x1152xf32>
    %21 = arith.mulf %20, %16 : vector<2x16x1152xf32>
    %22 = arith.addf %17, %21 : vector<2x16x1152xf32>
    %23 = vector.broadcast %14 : vector<2x16x1xf32> to vector<2x16x1152xf32>
    %24 = arith.mulf %22, %23 : vector<2x16x1152xf32>
    %c0_15 = arith.constant 0 : index
    %c0_16 = arith.constant 0 : index
    %25 = vector.load %arg5[%c0_15, %c0_16] : memref<1x1152xf32, #tpu.memory_space<vmem>>, vector<1x1152xf32>
    %26 = vector.shape_cast %25 : vector<1x1152xf32> to vector<1x1x1152xf32>
    %27 = vector.broadcast %26 : vector<1x1x1152xf32> to vector<2x16x1152xf32>
    %28 = arith.addf %24, %27 : vector<2x16x1152xf32>
    %29 = vector.extract_strided_slice %28 {offsets = [0, 0, 0], sizes = [2, 16, 128], strides = [1, 1, 1]} : vector<2x16x1152xf32> to vector<2x16x128xf32>
    %c0_17 = arith.constant 0 : index
    %c0_18 = arith.constant 0 : index
    %c0_19 = arith.constant 0 : index
    %30 = vector.load %arg6[%c0_17, %c0_18, %c0_19] : memref<2x16x128xf32, #tpu.memory_space<vmem>>, vector<2x16x128xf32>
    tpu.vector_store %arg6[%c0_17, %c0_18, %c0_19], %29 {strides = array<i32>} : memref<2x16x128xf32, #tpu.memory_space<vmem>>, vector<2x16x128xf32>,
    %31 = vector.extract_strided_slice %28 {offsets = [0, 0, 128], sizes = [2, 16, 128], strides = [1, 1, 1]} : vector<2x16x1152xf32> to vector<2x16x128xf32>
    %32 = vector.extract_strided_slice %28 {offsets = [0, 0, 640], sizes = [2, 16, 128], strides = [1, 1, 1]} : vector<2x16x1152xf32> to vector<2x16x128xf32>
    %cst_20 = arith.constant dense<0.000000e+00> : vector<2x16x16xf32>
    %33 = tpu.matmul %31, %32, %cst_20 {dimension_numbers = #tpu.dot_dimension_numbers<[2], [2], [1], [1], [0, 0, 0, 1, 1, 1], [0], [0]>} : vector<2x16x128xf32>, vector<2x16x128xf32>, vector<2x16x16xf32> -> vector<2x16x16xf32>
    %34 = math.tanh %33 : vector<2x16x16xf32>
    %c0_21 = arith.constant 0 : index
    %c0_22 = arith.constant 0 : index
    %c0_23 = arith.constant 0 : index
    %35 = vector.load %arg8[%c0_21, %c0_22, %c0_23] : memref<2x16x16xf32, #tpu.memory_space<vmem>>, vector<2x16x16xf32>
    tpu.vector_store %arg8[%c0_21, %c0_22, %c0_23], %34 {strides = array<i32>} : memref<2x16x16xf32, #tpu.memory_space<vmem>>, vector<2x16x16xf32>,
    %36 = vector.extract_strided_slice %28 {offsets = [0, 0, 256], sizes = [2, 16, 128], strides = [1, 1, 1]} : vector<2x16x1152xf32> to vector<2x16x128xf32>
    %37 = vector.extract_strided_slice %28 {offsets = [0, 0, 768], sizes = [2, 16, 128], strides = [1, 1, 1]} : vector<2x16x1152xf32> to vector<2x16x128xf32>
    %cst_24 = arith.constant dense<0.000000e+00> : vector<2x16x16xf32>
    %38 = tpu.matmul %36, %37, %cst_24 {dimension_numbers = #tpu.dot_dimension_numbers<[2], [2], [1], [1], [0, 0, 0, 1, 1, 1], [0], [0]>} : vector<2x16x128xf32>, vector<2x16x128xf32>, vector<2x16x16xf32> -> vector<2x16x16xf32>
    %39 = math.tanh %38 : vector<2x16x16xf32>
    %c0_25 = arith.constant 0 : index
    %c0_26 = arith.constant 0 : index
    %c0_27 = arith.constant 0 : index
    %40 = vector.load %arg8[%c0_25, %c0_26, %c0_27] : memref<2x16x16xf32, #tpu.memory_space<vmem>>, vector<2x16x16xf32>
    %41 = arith.addf %40, %39 : vector<2x16x16xf32>
    %c0_28 = arith.constant 0 : index
    %c0_29 = arith.constant 0 : index
    %c0_30 = arith.constant 0 : index
    %42 = vector.load %arg8[%c0_28, %c0_29, %c0_30] : memref<2x16x16xf32, #tpu.memory_space<vmem>>, vector<2x16x16xf32>
    tpu.vector_store %arg8[%c0_28, %c0_29, %c0_30], %41 {strides = array<i32>} : memref<2x16x16xf32, #tpu.memory_space<vmem>>, vector<2x16x16xf32>,
    %43 = vector.extract_strided_slice %28 {offsets = [0, 0, 384], sizes = [2, 16, 128], strides = [1, 1, 1]} : vector<2x16x1152xf32> to vector<2x16x128xf32>
    %44 = vector.extract_strided_slice %28 {offsets = [0, 0, 896], sizes = [2, 16, 128], strides = [1, 1, 1]} : vector<2x16x1152xf32> to vector<2x16x128xf32>
    %cst_31 = arith.constant dense<0.000000e+00> : vector<2x16x16xf32>
    %45 = tpu.matmul %43, %44, %cst_31 {dimension_numbers = #tpu.dot_dimension_numbers<[2], [2], [1], [1], [0, 0, 0, 1, 1, 1], [0], [0]>} : vector<2x16x128xf32>, vector<2x16x128xf32>, vector<2x16x16xf32> -> vector<2x16x16xf32>
    %46 = math.tanh %45 : vector<2x16x16xf32>
    %c0_32 = arith.constant 0 : index
    %c0_33 = arith.constant 0 : index
    %c0_34 = arith.constant 0 : index
    %47 = vector.load %arg8[%c0_32, %c0_33, %c0_34] : memref<2x16x16xf32, #tpu.memory_space<vmem>>, vector<2x16x16xf32>
    %48 = arith.addf %47, %46 : vector<2x16x16xf32>
    %c0_35 = arith.constant 0 : index
    %c0_36 = arith.constant 0 : index
    %c0_37 = arith.constant 0 : index
    %49 = vector.load %arg8[%c0_35, %c0_36, %c0_37] : memref<2x16x16xf32, #tpu.memory_space<vmem>>, vector<2x16x16xf32>
    tpu.vector_store %arg8[%c0_35, %c0_36, %c0_37], %48 {strides = array<i32>} : memref<2x16x16xf32, #tpu.memory_space<vmem>>, vector<2x16x16xf32>,
    %50 = vector.extract_strided_slice %28 {offsets = [0, 0, 512], sizes = [2, 16, 128], strides = [1, 1, 1]} : vector<2x16x1152xf32> to vector<2x16x128xf32>
    %51 = vector.extract_strided_slice %28 {offsets = [0, 0, 1024], sizes = [2, 16, 128], strides = [1, 1, 1]} : vector<2x16x1152xf32> to vector<2x16x128xf32>
    %cst_38 = arith.constant dense<0.000000e+00> : vector<2x16x16xf32>
    %52 = tpu.matmul %50, %51, %cst_38 {dimension_numbers = #tpu.dot_dimension_numbers<[2], [2], [1], [1], [0, 0, 0, 1, 1, 1], [0], [0]>} : vector<2x16x128xf32>, vector<2x16x128xf32>, vector<2x16x16xf32> -> vector<2x16x16xf32>
    %53 = math.tanh %52 : vector<2x16x16xf32>
    %c0_39 = arith.constant 0 : index
    %c0_40 = arith.constant 0 : index
    %c0_41 = arith.constant 0 : index
    %54 = vector.load %arg8[%c0_39, %c0_40, %c0_41] : memref<2x16x16xf32, #tpu.memory_space<vmem>>, vector<2x16x16xf32>
    %55 = arith.addf %54, %53 : vector<2x16x16xf32>
    %c0_42 = arith.constant 0 : index
    %c0_43 = arith.constant 0 : index
    %c0_44 = arith.constant 0 : index
    %56 = vector.load %arg8[%c0_42, %c0_43, %c0_44] : memref<2x16x16xf32, #tpu.memory_space<vmem>>, vector<2x16x16xf32>
    tpu.vector_store %arg8[%c0_42, %c0_43, %c0_44], %55 {strides = array<i32>} : memref<2x16x16xf32, #tpu.memory_space<vmem>>, vector<2x16x16xf32>,
    %c0_45 = arith.constant 0 : index
    %c0_46 = arith.constant 0 : index
    %c0_47 = arith.constant 0 : index
    %57 = vector.load %arg8[%c0_45, %c0_46, %c0_47] : memref<2x16x16xf32, #tpu.memory_space<vmem>>, vector<1x16x16xf32>
    %58 = vector.shape_cast %57 : vector<1x16x16xf32> to vector<16x16xf32>
    %59 = tpu.transpose %58, [1, 0] : vector<16x16xf32> -> vector<16x16xf32>
    %60 = arith.addf %58, %59 : vector<16x16xf32>
    %cst_48 = arith.constant 1.250000e-01 : f32
    %61 = vector.broadcast %cst_48 : f32 to vector<16x16xf32>
    %62 = arith.mulf %60, %61 : vector<16x16xf32>
    %c0_49 = arith.constant 0 : index
    %c0_50 = arith.constant 0 : index
    %c0_51 = arith.constant 0 : index
    %63 = vector.load %arg7[%c0_49, %c0_50, %c0_51] : memref<2x16x16xf32, #tpu.memory_space<vmem>>, vector<1x16x16xf32>
    %64 = vector.shape_cast %63 : vector<1x16x16xf32> to vector<16x16xf32>
    %65 = vector.shape_cast %62 : vector<16x16xf32> to vector<1x16x16xf32>
    tpu.vector_store %arg7[%c0_49, %c0_50, %c0_51], %65 {strides = array<i32>} : memref<2x16x16xf32, #tpu.memory_space<vmem>>, vector<1x16x16xf32>,
    %c1 = arith.constant 1 : index
    %c0_52 = arith.constant 0 : index
    %c0_53 = arith.constant 0 : index
    %66 = vector.load %arg8[%c1, %c0_52, %c0_53] : memref<2x16x16xf32, #tpu.memory_space<vmem>>, vector<1x16x16xf32>
    %67 = vector.shape_cast %66 : vector<1x16x16xf32> to vector<16x16xf32>
    %68 = tpu.transpose %67, [1, 0] : vector<16x16xf32> -> vector<16x16xf32>
    %69 = arith.addf %67, %68 : vector<16x16xf32>
    %cst_54 = arith.constant 1.250000e-01 : f32
    %70 = vector.broadcast %cst_54 : f32 to vector<16x16xf32>
    %71 = arith.mulf %69, %70 : vector<16x16xf32>
    %c1_55 = arith.constant 1 : index
    %c0_56 = arith.constant 0 : index
    %c0_57 = arith.constant 0 : index
    %72 = vector.load %arg7[%c1_55, %c0_56, %c0_57] : memref<2x16x16xf32, #tpu.memory_space<vmem>>, vector<1x16x16xf32>
    %73 = vector.shape_cast %72 : vector<1x16x16xf32> to vector<16x16xf32>
    %74 = vector.shape_cast %71 : vector<16x16xf32> to vector<1x16x16xf32>
    tpu.vector_store %arg7[%c1_55, %c0_56, %c0_57], %74 {strides = array<i32>} : memref<2x16x16xf32, #tpu.memory_space<vmem>>, vector<1x16x16xf32>,
    return
  }
  func.func @transform_0(%arg0: i32) -> (i32, i32, i32) {
    %c0_i32 = arith.constant 0 : i32
    %c0_i32_0 = arith.constant 0 : i32
    %c0_i32_1 = arith.constant 0 : i32
    return %arg0, %c0_i32, %c0_i32_0 : i32, i32, i32
  }
  func.func @transform_1(%arg0: i32) -> (i32, i32, i32) {
    %c0_i32 = arith.constant 0 : i32
    %c0_i32_0 = arith.constant 0 : i32
    %c0_i32_1 = arith.constant 0 : i32
    return %arg0, %c0_i32, %c0_i32_0 : i32, i32, i32
  }
  func.func @transform_2(%arg0: i32) -> (i32, i32, i32) {
    %c0_i32 = arith.constant 0 : i32
    %c0_i32_0 = arith.constant 0 : i32
    %c0_i32_1 = arith.constant 0 : i32
    return %arg0, %c0_i32, %c0_i32_0 : i32, i32, i32
  }
  func.func @transform_3(%arg0: i32) -> (i32, i32) {
    %c0_i32 = arith.constant 0 : i32
    %c0_i32_0 = arith.constant 0 : i32
    %c0_i32_1 = arith.constant 0 : i32
    return %c0_i32, %c0_i32_0 : i32, i32
  }
  func.func @transform_4(%arg0: i32) -> (i32, i32) {
    %c0_i32 = arith.constant 0 : i32
    %c0_i32_0 = arith.constant 0 : i32
    %c0_i32_1 = arith.constant 0 : i32
    return %c0_i32, %c0_i32_0 : i32, i32
  }
  func.func @transform_5(%arg0: i32) -> (i32, i32, i32) {
    %c0_i32 = arith.constant 0 : i32
    %c0_i32_0 = arith.constant 0 : i32
    %c0_i32_1 = arith.constant 0 : i32
    return %arg0, %c0_i32, %c0_i32_0 : i32, i32, i32
  }
  func.func @transform_6(%arg0: i32) -> (i32, i32, i32) {
    %c0_i32 = arith.constant 0 : i32
    %c0_i32_0 = arith.constant 0 : i32
    %c0_i32_1 = arith.constant 0 : i32
    return %arg0, %c0_i32, %c0_i32_0 : i32, i32, i32
  }
}

</mosaic_0001>

<llo_original>
// kernel: tpu_custom_call.1
$region0: #{tpu_custom_call.1}
  #allocation0 [shape = 'u32[]', space=smem, size = 0x4, offset = 0x4, fixed_abs, tag = 'smem constant byte address 0x4 - core index']
  #allocation1 [shape = 'u32[72,128]{1,0:T(1,128)}', space=vmem, size = 0x9000, scoped, tag = 'internal scratch']
  #allocation2 [shape = 'f32[2,16,16]{2,1,0:T(8,128)}', space=vmem, size = 0x4000, scoped, tag = 'scratch operand']
  %s0 = inlined_call_operand.vmem [shape: f32[2,16,8], index: 0, kind: input, shape index: {}]
  %s1 = inlined_call_operand.hbm [shape: f32[2,16,16], index: 1, kind: input, shape index: {}]
  %s2 = inlined_call_operand.vmem [shape: f32[2,16,1], index: 2, kind: input, shape index: {}]
  %s3 = inlined_call_operand.vmem [shape: f32[8,1152], index: 3, kind: input, shape index: {}]
  %s4 = inlined_call_operand.vmem [shape: f32[1,1152], index: 4, kind: input, shape index: {}]
  %s5 = inlined_call_operand.hbm [shape: f32[2,16,128], index: 5, kind: output, shape index: {0}]
  %s6 = inlined_call_operand.hbm [shape: f32[2,16,16], index: 6, kind: output, shape index: {1}]
  %7 = xla_tuple %s5, %s6
  %s8 = sld [smem:[#allocation0]]
  $region42: #{tpu_custom_call.1} parent=0
    _
  %s10 = ssub.s32 1, %s8
  %s11 = scalar_select 0, %s10, %s8
  $region1: #{tpu_custom_call.1} parent=0
    #allocation3 [shape = 'u8[16384]{0}', space=vmem, size = 0x4000, scoped, tag = 'input window, operand 1, single buffered']
    #allocation4 [shape = 's32[1]{0}', space=sflag, size = 0x4, scoped, tag = 'scoped memory for tpu_custom_call.1']
    #allocation5 [shape = 's32[1]{0}', space=sflag, size = 0x4, scoped, tag = 'scoped memory for tpu_custom_call.1']
    #allocation6 [shape = 'u8[16384]{0}', space=vmem, size = 0x4000, scoped, tag = 'output window, operand 0, single buffered']
    #allocation7 [shape = 'u8[16384]{0}', space=vmem, size = 0x4000, scoped, tag = 'output window, operand 1, single buffered']
    #allocation8 [shape = 's32[1]{0}', space=sflag, size = 0x4, scoped, tag = 'scoped memory for tpu_custom_call.1']
    %12 = vsyncpa [#allocation4], 0
    %13 = vsyncpa [#allocation5], 0
    %14 = vsyncpa [#allocation8], 0
    // Predicated region
    $region2: #{tpu_custom_call.1} parent=1 // pred_check
      _
    $region3: #{tpu_custom_call.1} parent=1 // pred_check_branch
      %16 = sbr.rel (0) target = $region5
    $region4: #{tpu_custom_call.1} parent=1 // pred_region
      _
    $region5: #{tpu_custom_call.1} parent=1 // pred_fallthru
      _
    // Predicated region
    $region6: #{tpu_custom_call.1} parent=1 // pred_check
      _
    $region7: #{tpu_custom_call.1} parent=1 // pred_check_branch
      %18 = sbr.rel (0) target = $region9
    $region8: #{tpu_custom_call.1} parent=1 // pred_region
      %20 = vsyncadd [#allocation4], 0
      %s21 = sshll.u32 %s1, 4
      %s22 = int_to_ptr.hbm [resolvable:$true] %s21
      %s23 = sshll.u32 [#allocation3], 4
      %s24 = int_to_ptr.vmem [resolvable:$true] %s23
      %29 = dma.hbm_to_vmem [thread:$0]  %s22, 512, %s24, [#allocation4], 128, 128, 8
    $region9: #{tpu_custom_call.1} parent=1 // pred_fallthru
      _
    // Predicated region
    $region10: #{tpu_custom_call.1} parent=1 // pred_check
      _
    $region11: #{tpu_custom_call.1} parent=1 // pred_check_branch
      %31 = sbr.rel (0) target = $region13
    $region12: #{tpu_custom_call.1} parent=1 // pred_region
      _
    $region13: #{tpu_custom_call.1} parent=1 // pred_fallthru
      _
    // Predicated region
    $region14: #{tpu_custom_call.1} parent=1 // pred_check
      _
    $region15: #{tpu_custom_call.1} parent=1 // pred_check_branch
      %33 = sbr.rel (0) target = $region17
    $region16: #{tpu_custom_call.1} parent=1 // pred_region
      _
    $region17: #{tpu_custom_call.1} parent=1 // pred_fallthru
      _
    // Predicated region
    $region18: #{tpu_custom_call.1} parent=1 // pred_check
      _
    $region19: #{tpu_custom_call.1} parent=1 // pred_check_branch
      %35 = sbr.rel (0) target = $region21
    $region20: #{tpu_custom_call.1} parent=1 // pred_region
      _
    $region21: #{tpu_custom_call.1} parent=1 // pred_fallthru
      _
    // Predicated region
    $region22: #{tpu_custom_call.1} parent=1 // pred_check
      _
    $region23: #{tpu_custom_call.1} parent=1 // pred_check_branch
      %37 = sbr.rel (0) target = $region25
    $region24: #{tpu_custom_call.1} parent=1 // pred_region
      %39 = dma.done [#allocation4], 512
    $region25: #{tpu_custom_call.1} parent=1 // pred_fallthru
      _
    %v40 = vld [vmem:[%s0] sm:$0xff]
    %v41 = vld [vmem:[%s0 + $0x8] sm:$0xff]
    %v42 = vld [vmem:[%s0 + $0x10] sm:$0xff]
    %v43 = vld [vmem:[%s0 + $0x18] sm:$0xff]
    %v44 = vld [vmem:[#allocation3] sm:$0xff]
    %v45 = vld [vmem:[#allocation3 + $0x8] sm:$0xff]
    %v46 = vld [vmem:[#allocation3 + $0x10] sm:$0xff]
    %v47 = vld [vmem:[#allocation3 + $0x18] sm:$0xff]
    %v48 = vld [vmem:[%s2] sm:$0xff]
    %v49 = vld [vmem:[%s2 + $0x8] sm:$0xff]
    %v50 = vld [vmem:[%s2 + $0x10] sm:$0xff]
    %v51 = vld [vmem:[%s2 + $0x18] sm:$0xff]
    %v52 = vld [vmem:[%s3] sm:$0xff]
    %v53 = vld [vmem:[%s3 + $0x8] sm:$0xff]
    %v54 = vld [vmem:[%s3 + $0x10] sm:$0xff]
    %v55 = vld [vmem:[%s3 + $0x18] sm:$0xff]
    %v56 = vld [vmem:[%s3 + $0x20] sm:$0xff]
    %v57 = vld [vmem:[%s3 + $0x28] sm:$0xff]
    %v58 = vld [vmem:[%s3 + $0x30] sm:$0xff]
    %v59 = vld [vmem:[%s3 + $0x38] sm:$0xff]
    %v60 = vld [vmem:[%s3 + $0x40] sm:$0xff]
    %vm61 = vcmask 64512
    %v63 = vsel %vm61, %v40, 0
    %v66 = vsel %vm61, %v41, 0
    %v69 = vsel %vm61, %v42, 0
    %v72 = vsel %vm61, %v43, 0
    %74 = vmatpush.msra.mxu0 0.0
    %75 = vmatpush.msra.mxu0 0.0
    %76 = vmatpush.msra.mxu0 0.0
    %77 = vmatpush.msra.mxu0 0.0
    %78 = vmatpush.msra.mxu0 0.0
    %79 = vmatpush.msra.mxu0 0.0
    %80 = vmatpush.msra.mxu0 0.0
    %81 = vmatpush.msra.mxu0 0.0
    %82 = vmatpush.msra.mxu0 0.0
    %83 = vmatpush.msra.mxu0 0.0
    %84 = vmatpush.msra.mxu0 0.0
    %85 = vmatpush.msra.mxu0 0.0
    %86 = vmatpush.msra.mxu0 0.0
    %87 = vmatpush.msra.mxu0 0.0
    %88 = vmatpush.msra.mxu0 0.0
    %89 = vmatpush.msra.mxu0 %v52
    %90 = vmatmul.f32.gmra.mxu0 %v63
    %v91 = vpop.f32.mrf.mxu0
    %v92 = vadd.f32 0.0, %v91
    %93 = vmatmul.f32.gmra.mxu0 %v66
    %v94 = vpop.f32.mrf.mxu0
    %v95 = vadd.f32 0.0, %v94
    %96 = vmatmul.f32.gmra.mxu0 %v69
    %v97 = vpop.f32.mrf.mxu0
    %v98 = vadd.f32 0.0, %v97
    %99 = vmatmul.f32.gmra.mxu0 %v72
    %v100 = vpop.f32.mrf.mxu0
    %v101 = vadd.f32 0.0, %v100
    %102 = vdwg.mxu0
    %103 = vmatpush.msra.mxu0 0.0
    %104 = vmatpush.msra.mxu0 0.0
    %105 = vmatpush.msra.mxu0 0.0
    %106 = vmatpush.msra.mxu0 0.0
    %107 = vmatpush.msra.mxu0 0.0
    %108 = vmatpush.msra.mxu0 0.0
    %109 = vmatpush.msra.mxu0 0.0
    %110 = vmatpush.msra.mxu0 0.0
    %111 = vmatpush.msra.mxu0 0.0
    %112 = vmatpush.msra.mxu0 0.0
    %113 = vmatpush.msra.mxu0 0.0
    %114 = vmatpush.msra.mxu0 0.0
    %115 = vmatpush.msra.mxu0 0.0
    %116 = vmatpush.msra.mxu0 0.0
    %117 = vmatpush.msra.mxu0 0.0
    %118 = vmatpush.msra.mxu0 %v53
    %119 = vmatmul.f32.gmra.mxu0 %v63
    %v120 = vpop.f32.mrf.mxu0
    %v121 = vadd.f32 0.0, %v120
    %122 = vmatmul.f32.gmra.mxu0 %v66
    %v123 = vpop.f32.mrf.mxu0
    %v124 = vadd.f32 0.0, %v123
    %125 = vmatmul.f32.gmra.mxu0 %v69
    %v126 = vpop.f32.mrf.mxu0
    %v127 = vadd.f32 0.0, %v126
    %128 = vmatmul.f32.gmra.mxu0 %v72
    %v129 = vpop.f32.mrf.mxu0
    %v130 = vadd.f32 0.0, %v129
    %131 = vdwg.mxu0
    %132 = vmatpush.msra.mxu0 0.0
    %133 = vmatpush.msra.mxu0 0.0
    %134 = vmatpush.msra.mxu0 0.0
    %135 = vmatpush.msra.mxu0 0.0
    %136 = vmatpush.msra.mxu0 0.0
    %137 = vmatpush.msra.mxu0 0.0
    %138 = vmatpush.msra.mxu0 0.0
    %139 = vmatpush.msra.mxu0 0.0
    %140 = vmatpush.msra.mxu0 0.0
    %141 = vmatpush.msra.mxu0 0.0
    %142 = vmatpush.msra.mxu0 0.0
    %143 = vmatpush.msra.mxu0 0.0
    %144 = vmatpush.msra.mxu0 0.0
    %145 = vmatpush.msra.mxu0 0.0
    %146 = vmatpush.msra.mxu0 0.0
    %147 = vmatpush.msra.mxu0 %v54
    %148 = vmatmul.f32.gmra.mxu0 %v63
    %v149 = vpop.f32.mrf.mxu0
    %v150 = vadd.f32 0.0, %v149
    %151 = vmatmul.f32.gmra.mxu0 %v66
    %v152 = vpop.f32.mrf.mxu0
    %v153 = vadd.f32 0.0, %v152
    %154 = vmatmul.f32.gmra.mxu0 %v69
    %v155 = vpop.f32.mrf.mxu0
    %v156 = vadd.f32 0.0, %v155
    %157 = vmatmul.f32.gmra.mxu0 %v72
    %v158 = vpop.f32.mrf.mxu0
    %v159 = vadd.f32 0.0, %v158
    %160 = vdwg.mxu0
    %161 = vmatpush.msra.mxu0 0.0
    %162 = vmatpush.msra.mxu0 0.0
    %163 = vmatpush.msra.mxu0 0.0
    %164 = vmatpush.msra.mxu0 0.0
    %165 = vmatpush.msra.mxu0 0.0
    %166 = vmatpush.msra.mxu0 0.0
    %167 = vmatpush.msra.mxu0 0.0
    %168 = vmatpush.msra.mxu0 0.0
    %169 = vmatpush.msra.mxu0 0.0
    %170 = vmatpush.msra.mxu0 0.0
    %171 = vmatpush.msra.mxu0 0.0
    %172 = vmatpush.msra.mxu0 0.0
    %173 = vmatpush.msra.mxu0 0.0
    %174 = vmatpush.msra.mxu0 0.0
    %175 = vmatpush.msra.mxu0 0.0
    %176 = vmatpush.msra.mxu0 %v55
    %177 = vmatmul.f32.gmra.mxu0 %v63
    %v178 = vpop.f32.mrf.mxu0
    %v179 = vadd.f32 0.0, %v178
    %180 = vmatmul.f32.gmra.mxu0 %v66
    %v181 = vpop.f32.mrf.mxu0
    %v182 = vadd.f32 0.0, %v181
    %183 = vmatmul.f32.gmra.mxu0 %v69
    %v184 = vpop.f32.mrf.mxu0
    %v185 = vadd.f32 0.0, %v184
    %186 = vmatmul.f32.gmra.mxu0 %v72
    %v187 = vpop.f32.mrf.mxu0
    %v188 = vadd.f32 0.0, %v187
    %189 = vdwg.mxu0
    %190 = vmatpush.msra.mxu0 0.0
    %191 = vmatpush.msra.mxu0 0.0
    %192 = vmatpush.msra.mxu0 0.0
    %193 = vmatpush.msra.mxu0 0.0
    %194 = vmatpush.msra.mxu0 0.0
    %195 = vmatpush.msra.mxu0 0.0
    %196 = vmatpush.msra.mxu0 0.0
    %197 = vmatpush.msra.mxu0 0.0
    %198 = vmatpush.msra.mxu0 0.0
    %199 = vmatpush.msra.mxu0 0.0
    %200 = vmatpush.msra.mxu0 0.0
    %201 = vmatpush.msra.mxu0 0.0
    %202 = vmatpush.msra.mxu0 0.0
    %203 = vmatpush.msra.mxu0 0.0
    %204 = vmatpush.msra.mxu0 0.0
    %205 = vmatpush.msra.mxu0 %v56
    %206 = vmatmul.f32.gmra.mxu0 %v63
    %v207 = vpop.f32.mrf.mxu0
    %v208 = vadd.f32 0.0, %v207
    %209 = vmatmul.f32.gmra.mxu0 %v66
    %v210 = vpop.f32.mrf.mxu0
    %v211 = vadd.f32 0.0, %v210
    %212 = vmatmul.f32.gmra.mxu0 %v69
    %v213 = vpop.f32.mrf.mxu0
    %v214 = vadd.f32 0.0, %v213
    %215 = vmatmul.f32.gmra.mxu0 %v72
    %v216 = vpop.f32.mrf.mxu0
    %v217 = vadd.f32 0.0, %v216
    %218 = vdwg.mxu0
    %219 = vmatpush.msra.mxu0 0.0
    %220 = vmatpush.msra.mxu0 0.0
    %221 = vmatpush.msra.mxu0 0.0
    %222 = vmatpush.msra.mxu0 0.0
    %223 = vmatpush.msra.mxu0 0.0
    %224 = vmatpush.msra.mxu0 0.0
    %225 = vmatpush.msra.mxu0 0.0
    %226 = vmatpush.msra.mxu0 0.0
    %227 = vmatpush.msra.mxu0 0.0
    %228 = vmatpush.msra.mxu0 0.0
    %229 = vmatpush.msra.mxu0 0.0
    %230 = vmatpush.msra.mxu0 0.0
    %231 = vmatpush.msra.mxu0 0.0
    %232 = vmatpush.msra.mxu0 0.0
    %233 = vmatpush.msra.mxu0 0.0
    %234 = vmatpush.msra.mxu0 %v57
    %235 = vmatmul.f32.gmra.mxu0 %v63
    %v236 = vpop.f32.mrf.mxu0
    %v237 = vadd.f32 0.0, %v236
    %238 = vmatmul.f32.gmra.mxu0 %v66
    %v239 = vpop.f32.mrf.mxu0
    %v240 = vadd.f32 0.0, %v239
    %241 = vmatmul.f32.gmra.mxu0 %v69
    %v242 = vpop.f32.mrf.mxu0
    %v243 = vadd.f32 0.0, %v242
    %244 = vmatmul.f32.gmra.mxu0 %v72
    %v245 = vpop.f32.mrf.mxu0
    %v246 = vadd.f32 0.0, %v245
    %247 = vdwg.mxu0
    %248 = vmatpush.msra.mxu0 0.0
    %249 = vmatpush.msra.mxu0 0.0
    %250 = vmatpush.msra.mxu0 0.0
    %251 = vmatpush.msra.mxu0 0.0
    %252 = vmatpush.msra.mxu0 0.0
    %253 = vmatpush.msra.mxu0 0.0
    %254 = vmatpush.msra.mxu0 0.0
    %255 = vmatpush.msra.mxu0 0.0
    %256 = vmatpush.msra.mxu0 0.0
    %257 = vmatpush.msra.mxu0 0.0
    %258 = vmatpush.msra.mxu0 0.0
    %259 = vmatpush.msra.mxu0 0.0
    %260 = vmatpush.msra.mxu0 0.0
    %261 = vmatpush.msra.mxu0 0.0
    %262 = vmatpush.msra.mxu0 0.0
    %263 = vmatpush.msra.mxu0 %v58
    %264 = vmatmul.f32.gmra.mxu0 %v63
    %v265 = vpop.f32.mrf.mxu0
    %v266 = vadd.f32 0.0, %v265
    %267 = vmatmul.f32.gmra.mxu0 %v66
    %v268 = vpop.f32.mrf.mxu0
    %v269 = vadd.f32 0.0, %v268
    %270 = vmatmul.f32.gmra.mxu0 %v69
    %v271 = vpop.f32.mrf.mxu0
    %v272 = vadd.f32 0.0, %v271
    %273 = vmatmul.f32.gmra.mxu0 %v72
    %v274 = vpop.f32.mrf.mxu0
    %v275 = vadd.f32 0.0, %v274
    %276 = vdwg.mxu0
    %277 = vmatpush.msra.mxu0 0.0
    %278 = vmatpush.msra.mxu0 0.0
    %279 = vmatpush.msra.mxu0 0.0
    %280 = vmatpush.msra.mxu0 0.0
    %281 = vmatpush.msra.mxu0 0.0
    %282 = vmatpush.msra.mxu0 0.0
    %283 = vmatpush.msra.mxu0 0.0
    %284 = vmatpush.msra.mxu0 0.0
    %285 = vmatpush.msra.mxu0 0.0
    %286 = vmatpush.msra.mxu0 0.0
    %287 = vmatpush.msra.mxu0 0.0
    %288 = vmatpush.msra.mxu0 0.0
    %289 = vmatpush.msra.mxu0 0.0
    %290 = vmatpush.msra.mxu0 0.0
    %291 = vmatpush.msra.mxu0 0.0
    %292 = vmatpush.msra.mxu0 %v59
    %293 = vmatmul.f32.gmra.mxu0 %v63
    %v294 = vpop.f32.mrf.mxu0
    %v295 = vadd.f32 0.0, %v294
    %296 = vmatmul.f32.gmra.mxu0 %v66
    %v297 = vpop.f32.mrf.mxu0
    %v298 = vadd.f32 0.0, %v297
    %299 = vmatmul.f32.gmra.mxu0 %v69
    %v300 = vpop.f32.mrf.mxu0
    %v301 = vadd.f32 0.0, %v300
    %302 = vmatmul.f32.gmra.mxu0 %v72
    %v303 = vpop.f32.mrf.mxu0
    %v304 = vadd.f32 0.0, %v303
    %305 = vdwg.mxu0
    %306 = vmatpush.msra.mxu0 0.0
    %307 = vmatpush.msra.mxu0 0.0
    %308 = vmatpush.msra.mxu0 0.0
    %309 = vmatpush.msra.mxu0 0.0
    %310 = vmatpush.msra.mxu0 0.0
    %311 = vmatpush.msra.mxu0 0.0
    %312 = vmatpush.msra.mxu0 0.0
    %313 = vmatpush.msra.mxu0 0.0
    %314 = vmatpush.msra.mxu0 0.0
    %315 = vmatpush.msra.mxu0 0.0
    %316 = vmatpush.msra.mxu0 0.0
    %317 = vmatpush.msra.mxu0 0.0
    %318 = vmatpush.msra.mxu0 0.0
    %319 = vmatpush.msra.mxu0 0.0
    %320 = vmatpush.msra.mxu0 0.0
    %321 = vmatpush.msra.mxu0 %v60
    %322 = vmatmul.f32.gmra.mxu0 %v63
    %v323 = vpop.f32.mrf.mxu0
    %v324 = vadd.f32 0.0, %v323
    %325 = vmatmul.f32.gmra.mxu0 %v66
    %v326 = vpop.f32.mrf.mxu0
    %v327 = vadd.f32 0.0, %v326
    %328 = vmatmul.f32.gmra.mxu0 %v69
    %v329 = vpop.f32.mrf.mxu0
    %v330 = vadd.f32 0.0, %v329
    %331 = vmatmul.f32.gmra.mxu0 %v72
    %v332 = vpop.f32.mrf.mxu0
    %v333 = vadd.f32 0.0, %v332
    %334 = vdwg.mxu0
    %vm335 = vcmask 130048
    %v336 = vsel %vm335, %v44, 0.0
    %337 = vadd.xlane.f32.xlu0 %v336
    %v338 = vpop.xlane.xlu0 %337
    %v339 = vsel %vm335, %v45, 0.0
    %340 = vadd.xlane.f32.xlu0 %v339
    %v341 = vpop.xlane.xlu0 %340
    %v342 = vsel %vm335, %v46, 0.0
    %343 = vadd.xlane.f32.xlu0 %v342
    %v344 = vpop.xlane.xlu0 %343
    %v345 = vsel %vm335, %v47, 0.0
    %346 = vadd.xlane.f32.xlu0 %v345
    %v347 = vpop.xlane.xlu0 %346
    %v348 = vsub.f32 %v338, %v48
    %v349 = vsub.f32 %v341, %v49
    %v350 = vsub.f32 %v344, %v50
    %v351 = vsub.f32 %v347, %v51
    %v352 = vadd.f32 %v348, 1.0
    %v353 = vadd.f32 %v349, 1.0
    %v354 = vadd.f32 %v350, 1.0
    %v355 = vadd.f32 %v351, 1.0
    %v356 = vmax.f32 %v352, 1.0
    %v357 = vmax.f32 %v353, 1.0
    %v358 = vmax.f32 %v354, 1.0
    %v359 = vmax.f32 %v355, 1.0
    %v360 = vrsqrt.pop %v356
    %v361 = vmul.f32 %v360, %v356
    %v362 = vmul.f32 %v361, %v360
    %v363 = vmul.f32 0.5, %v362
    %v364 = vsub.f32 1.5, %v363
    %v365 = vmul.f32 %v360, %v364
    %vm366 = vweird.f32 %v356
    %vm367 = vweird.f32 %v360
    %vm368 = vmor %vm366, %vm367
    %v369 = vsel %vm368, %v360, %v365
    %v370 = vrsqrt.pop %v357
    %v371 = vmul.f32 %v370, %v357
    %v372 = vmul.f32 %v371, %v370
    %v373 = vmul.f32 0.5, %v372
    %v374 = vsub.f32 1.5, %v373
    %v375 = vmul.f32 %v370, %v374
    %vm376 = vweird.f32 %v357
    %vm377 = vweird.f32 %v370
    %vm378 = vmor %vm376, %vm377
    %v379 = vsel %vm378, %v370, %v375
    %v380 = vrsqrt.pop %v358
    %v381 = vmul.f32 %v380, %v358
    %v382 = vmul.f32 %v381, %v380
    %v383 = vmul.f32 0.5, %v382
    %v384 = vsub.f32 1.5, %v383
    %v385 = vmul.f32 %v380, %v384
    %vm386 = vweird.f32 %v358
    %vm387 = vweird.f32 %v380
    %vm388 = vmor %vm386, %vm387
    %v389 = vsel %vm388, %v380, %v385
    %v390 = vrsqrt.pop %v359
    %v391 = vmul.f32 %v390, %v359
    %v392 = vmul.f32 %v391, %v390
    %v393 = vmul.f32 0.5, %v392
    %v394 = vsub.f32 1.5, %v393
    %v395 = vmul.f32 %v390, %v394
    %vm396 = vweird.f32 %v359
    %vm397 = vweird.f32 %v390
    %vm398 = vmor %vm396, %vm397
    %v399 = vsel %vm398, %v390, %v395
    %401 = vset.pattern.permute.xlu0 0
    %402 = vperm.xlu0 %401, %v369
    %v403 = vpop.permute.xlu0 %402
    %406 = vset.pattern.permute.xlu0 0
    %407 = vperm.xlu0 %406, %v379
    %v408 = vpop.permute.xlu0 %407
    %411 = vset.pattern.permute.xlu0 0
    %412 = vperm.xlu0 %411, %v389
    %v413 = vpop.permute.xlu0 %412
    %416 = vset.pattern.permute.xlu0 0
    %417 = vperm.xlu0 %416, %v399
    %v418 = vpop.permute.xlu0 %417
    %v420 = vmul.f32 %v92, %v403
    %v421 = vmul.f32 %v121, %v403
    %v422 = vmul.f32 %v150, %v403
    %v423 = vmul.f32 %v179, %v403
    %v424 = vmul.f32 %v208, %v403
    %v425 = vmul.f32 %v237, %v403
    %v426 = vmul.f32 %v266, %v403
    %v427 = vmul.f32 %v295, %v403
    %v428 = vmul.f32 %v324, %v403
    %v429 = vmul.f32 %v95, %v408
    %v430 = vmul.f32 %v124, %v408
    %v431 = vmul.f32 %v153, %v408
    %v432 = vmul.f32 %v182, %v408
    %v433 = vmul.f32 %v211, %v408
    %v434 = vmul.f32 %v240, %v408
    %v435 = vmul.f32 %v269, %v408
    %v436 = vmul.f32 %v298, %v408
    %v437 = vmul.f32 %v327, %v408
    %v438 = vmul.f32 %v98, %v413
    %v439 = vmul.f32 %v127, %v413
    %v440 = vmul.f32 %v156, %v413
    %v441 = vmul.f32 %v185, %v413
    %v442 = vmul.f32 %v214, %v413
    %v443 = vmul.f32 %v243, %v413
    %v444 = vmul.f32 %v272, %v413
    %v445 = vmul.f32 %v301, %v413
    %v446 = vmul.f32 %v330, %v413
    %v447 = vmul.f32 %v101, %v418
    %v448 = vmul.f32 %v130, %v418
    %v449 = vmul.f32 %v159, %v418
    %v450 = vmul.f32 %v188, %v418
    %v451 = vmul.f32 %v217, %v418
    %v452 = vmul.f32 %v246, %v418
    %v453 = vmul.f32 %v275, %v418
    %v454 = vmul.f32 %v304, %v418
    %v455 = vmul.f32 %v333, %v418
    %v456 = vsub.f32 1.0, %v48
    %v457 = vsub.f32 1.0, %v49
    %v458 = vsub.f32 1.0, %v50
    %v459 = vsub.f32 1.0, %v51
    %461 = vset.pattern.permute.xlu0 0
    %462 = vperm.xlu0 %461, %v456
    %v463 = vpop.permute.xlu0 %462
    %466 = vset.pattern.permute.xlu0 0
    %467 = vperm.xlu0 %466, %v457
    %v468 = vpop.permute.xlu0 %467
    %471 = vset.pattern.permute.xlu0 0
    %472 = vperm.xlu0 %471, %v458
    %v473 = vpop.permute.xlu0 %472
    %476 = vset.pattern.permute.xlu0 0
    %477 = vperm.xlu0 %476, %v459
    %v478 = vpop.permute.xlu0 %477
    %v480 = vmul.f32 %v463, %v420
    %v481 = vmul.f32 %v463, %v421
    %v482 = vmul.f32 %v463, %v422
    %v483 = vmul.f32 %v463, %v423
    %v484 = vmul.f32 %v463, %v424
    %v485 = vmul.f32 %v463, %v425
    %v486 = vmul.f32 %v463, %v426
    %v487 = vmul.f32 %v463, %v427
    %v488 = vmul.f32 %v463, %v428
    %v489 = vmul.f32 %v468, %v429
    %v490 = vmul.f32 %v468, %v430
    %v491 = vmul.f32 %v468, %v431
    %v492 = vmul.f32 %v468, %v432
    %v493 = vmul.f32 %v468, %v433
    %v494 = vmul.f32 %v468, %v434
    %v495 = vmul.f32 %v468, %v435
    %v496 = vmul.f32 %v468, %v436
    %v497 = vmul.f32 %v468, %v437
    %v498 = vmul.f32 %v473, %v438
    %v499 = vmul.f32 %v473, %v439
    %v500 = vmul.f32 %v473, %v440
    %v501 = vmul.f32 %v473, %v441
    %v502 = vmul.f32 %v473, %v442
    %v503 = vmul.f32 %v473, %v443
    %v504 = vmul.f32 %v473, %v444
    %v505 = vmul.f32 %v473, %v445
    %v506 = vmul.f32 %v473, %v446
    %v507 = vmul.f32 %v478, %v447
    %v508 = vmul.f32 %v478, %v448
    %v509 = vmul.f32 %v478, %v449
    %v510 = vmul.f32 %v478, %v450
    %v511 = vmul.f32 %v478, %v451
    %v512 = vmul.f32 %v478, %v452
    %v513 = vmul.f32 %v478, %v453
    %v514 = vmul.f32 %v478, %v454
    %v515 = vmul.f32 %v478, %v455
    %v517 = vsel %vm335, %v44, 0
    %v520 = vsel %vm335, %v45, 0
    %522 = vmatpush.msra.mxu0 0.0
    %523 = vmatpush.msra.mxu0 0.0
    %524 = vmatpush.msra.mxu0 0.0
    %525 = vmatpush.msra.mxu0 0.0
    %526 = vmatpush.msra.mxu0 0.0
    %527 = vmatpush.msra.mxu0 0.0
    %528 = vmatpush.msra.mxu0 0.0
    %529 = vmatpush.msra.mxu0 0.0
    %530 = vmatpush.msra.mxu0 0.0
    %531 = vmatpush.msra.mxu0 0.0
    %532 = vmatpush.msra.mxu0 0.0
    %533 = vmatpush.msra.mxu0 0.0
    %534 = vmatpush.msra.mxu0 0.0
    %535 = vmatpush.msra.mxu0 0.0
    %536 = vmatpush.msra.mxu0 %v429
    %537 = vmatpush.msra.mxu0 %v420
    %538 = vmatmul.f32.gmra.mxu0 %v517
    %v539 = vpop.f32.mrf.mxu0
    %v540 = vadd.f32 %v480, %v539
    %541 = vmatmul.f32.gmra.mxu0 %v520
    %v542 = vpop.f32.mrf.mxu0
    %v543 = vadd.f32 %v489, %v542
    %544 = vdwg.mxu0
    %545 = vmatpush.msra.mxu0 0.0
    %546 = vmatpush.msra.mxu0 0.0
    %547 = vmatpush.msra.mxu0 0.0
    %548 = vmatpush.msra.mxu0 0.0
    %549 = vmatpush.msra.mxu0 0.0
    %550 = vmatpush.msra.mxu0 0.0
    %551 = vmatpush.msra.mxu0 0.0
    %552 = vmatpush.msra.mxu0 0.0
    %553 = vmatpush.msra.mxu0 0.0
    %554 = vmatpush.msra.mxu0 0.0
    %555 = vmatpush.msra.mxu0 0.0
    %556 = vmatpush.msra.mxu0 0.0
    %557 = vmatpush.msra.mxu0 0.0
    %558 = vmatpush.msra.mxu0 0.0
    %559 = vmatpush.msra.mxu0 %v430
    %560 = vmatpush.msra.mxu0 %v421
    %561 = vmatmul.f32.gmra.mxu0 %v517
    %v562 = vpop.f32.mrf.mxu0
    %v563 = vadd.f32 %v481, %v562
    %564 = vmatmul.f32.gmra.mxu0 %v520
    %v565 = vpop.f32.mrf.mxu0
    %v566 = vadd.f32 %v490, %v565
    %567 = vdwg.mxu0
    %568 = vmatpush.msra.mxu0 0.0
    %569 = vmatpush.msra.mxu0 0.0
    %570 = vmatpush.msra.mxu0 0.0
    %571 = vmatpush.msra.mxu0 0.0
    %572 = vmatpush.msra.mxu0 0.0
    %573 = vmatpush.msra.mxu0 0.0
    %574 = vmatpush.msra.mxu0 0.0
    %575 = vmatpush.msra.mxu0 0.0
    %576 = vmatpush.msra.mxu0 0.0
    %577 = vmatpush.msra.mxu0 0.0
    %578 = vmatpush.msra.mxu0 0.0
    %579 = vmatpush.msra.mxu0 0.0
    %580 = vmatpush.msra.mxu0 0.0
    %581 = vmatpush.msra.mxu0 0.0
    %582 = vmatpush.msra.mxu0 %v431
    %583 = vmatpush.msra.mxu0 %v422
    %584 = vmatmul.f32.gmra.mxu0 %v517
    %v585 = vpop.f32.mrf.mxu0
    %v586 = vadd.f32 %v482, %v585
    %587 = vmatmul.f32.gmra.mxu0 %v520
    %v588 = vpop.f32.mrf.mxu0
    %v589 = vadd.f32 %v491, %v588
    %590 = vdwg.mxu0
    %591 = vmatpush.msra.mxu0 0.0
    %592 = vmatpush.msra.mxu0 0.0
    %593 = vmatpush.msra.mxu0 0.0
    %594 = vmatpush.msra.mxu0 0.0
    %595 = vmatpush.msra.mxu0 0.0
    %596 = vmatpush.msra.mxu0 0.0
    %597 = vmatpush.msra.mxu0 0.0
    %598 = vmatpush.msra.mxu0 0.0
    %599 = vmatpush.msra.mxu0 0.0
    %600 = vmatpush.msra.mxu0 0.0
    %601 = vmatpush.msra.mxu0 0.0
    %602 = vmatpush.msra.mxu0 0.0
    %603 = vmatpush.msra.mxu0 0.0
    %604 = vmatpush.msra.mxu0 0.0
    %605 = vmatpush.msra.mxu0 %v432
    %606 = vmatpush.msra.mxu0 %v423
    %607 = vmatmul.f32.gmra.mxu0 %v517
    %v608 = vpop.f32.mrf.mxu0
    %v609 = vadd.f32 %v483, %v608
    %610 = vmatmul.f32.gmra.mxu0 %v520
    %v611 = vpop.f32.mrf.mxu0
    %v612 = vadd.f32 %v492, %v611
    %613 = vdwg.mxu0
    %614 = vmatpush.msra.mxu0 0.0
    %615 = vmatpush.msra.mxu0 0.0
    %616 = vmatpush.msra.mxu0 0.0
    %617 = vmatpush.msra.mxu0 0.0
    %618 = vmatpush.msra.mxu0 0.0
    %619 = vmatpush.msra.mxu0 0.0
    %620 = vmatpush.msra.mxu0 0.0
    %621 = vmatpush.msra.mxu0 0.0
    %622 = vmatpush.msra.mxu0 0.0
    %623 = vmatpush.msra.mxu0 0.0
    %624 = vmatpush.msra.mxu0 0.0
    %625 = vmatpush.msra.mxu0 0.0
    %626 = vmatpush.msra.mxu0 0.0
    %627 = vmatpush.msra.mxu0 0.0
    %628 = vmatpush.msra.mxu0 %v433
    %629 = vmatpush.msra.mxu0 %v424
    %630 = vmatmul.f32.gmra.mxu0 %v517
    %v631 = vpop.f32.mrf.mxu0
    %v632 = vadd.f32 %v484, %v631
    %633 = vmatmul.f32.gmra.mxu0 %v520
    %v634 = vpop.f32.mrf.mxu0
    %v635 = vadd.f32 %v493, %v634
    %636 = vdwg.mxu0
    %637 = vmatpush.msra.mxu0 0.0
    %638 = vmatpush.msra.mxu0 0.0
    %639 = vmatpush.msra.mxu0 0.0
    %640 = vmatpush.msra.mxu0 0.0
    %641 = vmatpush.msra.mxu0 0.0
    %642 = vmatpush.msra.mxu0 0.0
    %643 = vmatpush.msra.mxu0 0.0
    %644 = vmatpush.msra.mxu0 0.0
    %645 = vmatpush.msra.mxu0 0.0
    %646 = vmatpush.msra.mxu0 0.0
    %647 = vmatpush.msra.mxu0 0.0
    %648 = vmatpush.msra.mxu0 0.0
    %649 = vmatpush.msra.mxu0 0.0
    %650 = vmatpush.msra.mxu0 0.0
    %651 = vmatpush.msra.mxu0 %v434
    %652 = vmatpush.msra.mxu0 %v425
    %653 = vmatmul.f32.gmra.mxu0 %v517
    %v654 = vpop.f32.mrf.mxu0
    %v655 = vadd.f32 %v485, %v654
    %656 = vmatmul.f32.gmra.mxu0 %v520
    %v657 = vpop.f32.mrf.mxu0
    %v658 = vadd.f32 %v494, %v657
    %659 = vdwg.mxu0
    %660 = vmatpush.msra.mxu0 0.0
    %661 = vmatpush.msra.mxu0 0.0
    %662 = vmatpush.msra.mxu0 0.0
    %663 = vmatpush.msra.mxu0 0.0
    %664 = vmatpush.msra.mxu0 0.0
    %665 = vmatpush.msra.mxu0 0.0
    %666 = vmatpush.msra.mxu0 0.0
    %667 = vmatpush.msra.mxu0 0.0
    %668 = vmatpush.msra.mxu0 0.0
    %669 = vmatpush.msra.mxu0 0.0
    %670 = vmatpush.msra.mxu0 0.0
    %671 = vmatpush.msra.mxu0 0.0
    %672 = vmatpush.msra.mxu0 0.0
    %673 = vmatpush.msra.mxu0 0.0
    %674 = vmatpush.msra.mxu0 %v435
    %675 = vmatpush.msra.mxu0 %v426
    %676 = vmatmul.f32.gmra.mxu0 %v517
    %v677 = vpop.f32.mrf.mxu0
    %v678 = vadd.f32 %v486, %v677
    %679 = vmatmul.f32.gmra.mxu0 %v520
    %v680 = vpop.f32.mrf.mxu0
    %v681 = vadd.f32 %v495, %v680
    %682 = vdwg.mxu0
    %683 = vmatpush.msra.mxu0 0.0
    %684 = vmatpush.msra.mxu0 0.0
    %685 = vmatpush.msra.mxu0 0.0
    %686 = vmatpush.msra.mxu0 0.0
    %687 = vmatpush.msra.mxu0 0.0
    %688 = vmatpush.msra.mxu0 0.0
    %689 = vmatpush.msra.mxu0 0.0
    %690 = vmatpush.msra.mxu0 0.0
    %691 = vmatpush.msra.mxu0 0.0
    %692 = vmatpush.msra.mxu0 0.0
    %693 = vmatpush.msra.mxu0 0.0
    %694 = vmatpush.msra.mxu0 0.0
    %695 = vmatpush.msra.mxu0 0.0
    %696 = vmatpush.msra.mxu0 0.0
    %697 = vmatpush.msra.mxu0 %v436
    %698 = vmatpush.msra.mxu0 %v427
    %699 = vmatmul.f32.gmra.mxu0 %v517
    %v700 = vpop.f32.mrf.mxu0
    %v701 = vadd.f32 %v487, %v700
    %702 = vmatmul.f32.gmra.mxu0 %v520
    %v703 = vpop.f32.mrf.mxu0
    %v704 = vadd.f32 %v496, %v703
    %705 = vdwg.mxu0
    %706 = vmatpush.msra.mxu0 0.0
    %707 = vmatpush.msra.mxu0 0.0
    %708 = vmatpush.msra.mxu0 0.0
    %709 = vmatpush.msra.mxu0 0.0
    %710 = vmatpush.msra.mxu0 0.0
    %711 = vmatpush.msra.mxu0 0.0
    %712 = vmatpush.msra.mxu0 0.0
    %713 = vmatpush.msra.mxu0 0.0
    %714 = vmatpush.msra.mxu0 0.0
    %715 = vmatpush.msra.mxu0 0.0
    %716 = vmatpush.msra.mxu0 0.0
    %717 = vmatpush.msra.mxu0 0.0
    %718 = vmatpush.msra.mxu0 0.0
    %719 = vmatpush.msra.mxu0 0.0
    %720 = vmatpush.msra.mxu0 %v437
    %721 = vmatpush.msra.mxu0 %v428
    %722 = vmatmul.f32.gmra.mxu0 %v517
    %v723 = vpop.f32.mrf.mxu0
    %v724 = vadd.f32 %v488, %v723
    %725 = vmatmul.f32.gmra.mxu0 %v520
    %v726 = vpop.f32.mrf.mxu0
    %v727 = vadd.f32 %v497, %v726
    %728 = vdwg.mxu0
    %v730 = vsel %vm335, %v46, 0
    %v733 = vsel %vm335, %v47, 0
    %735 = vmatpush.msra.mxu0 0.0
    %736 = vmatpush.msra.mxu0 0.0
    %737 = vmatpush.msra.mxu0 0.0
    %738 = vmatpush.msra.mxu0 0.0
    %739 = vmatpush.msra.mxu0 0.0
    %740 = vmatpush.msra.mxu0 0.0
    %741 = vmatpush.msra.mxu0 0.0
    %742 = vmatpush.msra.mxu0 0.0
    %743 = vmatpush.msra.mxu0 0.0
    %744 = vmatpush.msra.mxu0 0.0
    %745 = vmatpush.msra.mxu0 0.0
    %746 = vmatpush.msra.mxu0 0.0
    %747 = vmatpush.msra.mxu0 0.0
    %748 = vmatpush.msra.mxu0 0.0
    %749 = vmatpush.msra.mxu0 %v447
    %750 = vmatpush.msra.mxu0 %v438
    %751 = vmatmul.f32.gmra.mxu0 %v730
    %v752 = vpop.f32.mrf.mxu0
    %v753 = vadd.f32 %v498, %v752
    %754 = vmatmul.f32.gmra.mxu0 %v733
    %v755 = vpop.f32.mrf.mxu0
    %v756 = vadd.f32 %v507, %v755
    %757 = vdwg.mxu0
    %758 = vmatpush.msra.mxu0 0.0
    %759 = vmatpush.msra.mxu0 0.0
    %760 = vmatpush.msra.mxu0 0.0
    %761 = vmatpush.msra.mxu0 0.0
    %762 = vmatpush.msra.mxu0 0.0
    %763 = vmatpush.msra.mxu0 0.0
    %764 = vmatpush.msra.mxu0 0.0
    %765 = vmatpush.msra.mxu0 0.0
    %766 = vmatpush.msra.mxu0 0.0
    %767 = vmatpush.msra.mxu0 0.0
    %768 = vmatpush.msra.mxu0 0.0
    %769 = vmatpush.msra.mxu0 0.0
    %770 = vmatpush.msra.mxu0 0.0
    %771 = vmatpush.msra.mxu0 0.0
    %772 = vmatpush.msra.mxu0 %v448
    %773 = vmatpush.msra.mxu0 %v439
    %774 = vmatmul.f32.gmra.mxu0 %v730
    %v775 = vpop.f32.mrf.mxu0
    %v776 = vadd.f32 %v499, %v775
    %777 = vmatmul.f32.gmra.mxu0 %v733
    %v778 = vpop.f32.mrf.mxu0
    %v779 = vadd.f32 %v508, %v778
    %780 = vdwg.mxu0
    %781 = vmatpush.msra.mxu0 0.0
    %782 = vmatpush.msra.mxu0 0.0
    %783 = vmatpush.msra.mxu0 0.0
    %784 = vmatpush.msra.mxu0 0.0
    %785 = vmatpush.msra.mxu0 0.0
    %786 = vmatpush.msra.mxu0 0.0
    %787 = vmatpush.msra.mxu0 0.0
    %788 = vmatpush.msra.mxu0 0.0
    %789 = vmatpush.msra.mxu0 0.0
    %790 = vmatpush.msra.mxu0 0.0
    %791 = vmatpush.msra.mxu0 0.0
    %792 = vmatpush.msra.mxu0 0.0
    %793 = vmatpush.msra.mxu0 0.0
    %794 = vmatpush.msra.mxu0 0.0
    %795 = vmatpush.msra.mxu0 %v449
    %796 = vmatpush.msra.mxu0 %v440
    %797 = vmatmul.f32.gmra.mxu0 %v730
    %v798 = vpop.f32.mrf.mxu0
    %v799 = vadd.f32 %v500, %v798
    %800 = vmatmul.f32.gmra.mxu0 %v733
    %v801 = vpop.f32.mrf.mxu0
    %v802 = vadd.f32 %v509, %v801
    %803 = vdwg.mxu0
    %804 = vmatpush.msra.mxu0 0.0
    %805 = vmatpush.msra.mxu0 0.0
    %806 = vmatpush.msra.mxu0 0.0
    %807 = vmatpush.msra.mxu0 0.0
    %808 = vmatpush.msra.mxu0 0.0
    %809 = vmatpush.msra.mxu0 0.0
    %810 = vmatpush.msra.mxu0 0.0
    %811 = vmatpush.msra.mxu0 0.0
    %812 = vmatpush.msra.mxu0 0.0
    %813 = vmatpush.msra.mxu0 0.0
    %814 = vmatpush.msra.mxu0 0.0
    %815 = vmatpush.msra.mxu0 0.0
    %816 = vmatpush.msra.mxu0 0.0
    %817 = vmatpush.msra.mxu0 0.0
    %818 = vmatpush.msra.mxu0 %v450
    %819 = vmatpush.msra.mxu0 %v441
    %820 = vmatmul.f32.gmra.mxu0 %v730
    %v821 = vpop.f32.mrf.mxu0
    %v822 = vadd.f32 %v501, %v821
    %823 = vmatmul.f32.gmra.mxu0 %v733
    %v824 = vpop.f32.mrf.mxu0
    %v825 = vadd.f32 %v510, %v824
    %826 = vdwg.mxu0
    %827 = vmatpush.msra.mxu0 0.0
    %828 = vmatpush.msra.mxu0 0.0
    %829 = vmatpush.msra.mxu0 0.0
    %830 = vmatpush.msra.mxu0 0.0
    %831 = vmatpush.msra.mxu0 0.0
    %832 = vmatpush.msra.mxu0 0.0
    %833 = vmatpush.msra.mxu0 0.0
    %834 = vmatpush.msra.mxu0 0.0
    %835 = vmatpush.msra.mxu0 0.0
    %836 = vmatpush.msra.mxu0 0.0
    %837 = vmatpush.msra.mxu0 0.0
    %838 = vmatpush.msra.mxu0 0.0
    %839 = vmatpush.msra.mxu0 0.0
    %840 = vmatpush.msra.mxu0 0.0
    %841 = vmatpush.msra.mxu0 %v451
    %842 = vmatpush.msra.mxu0 %v442
    %843 = vmatmul.f32.gmra.mxu0 %v730
    %v844 = vpop.f32.mrf.mxu0
    %v845 = vadd.f32 %v502, %v844
    %846 = vmatmul.f32.gmra.mxu0 %v733
    %v847 = vpop.f32.mrf.mxu0
    %v848 = vadd.f32 %v511, %v847
    %849 = vdwg.mxu0
    %850 = vmatpush.msra.mxu0 0.0
    %851 = vmatpush.msra.mxu0 0.0
    %852 = vmatpush.msra.mxu0 0.0
    %853 = vmatpush.msra.mxu0 0.0
    %854 = vmatpush.msra.mxu0 0.0
    %855 = vmatpush.msra.mxu0 0.0
    %856 = vmatpush.msra.mxu0 0.0
    %857 = vmatpush.msra.mxu0 0.0
    %858 = vmatpush.msra.mxu0 0.0
    %859 = vmatpush.msra.mxu0 0.0
    %860 = vmatpush.msra.mxu0 0.0
    %861 = vmatpush.msra.mxu0 0.0
    %862 = vmatpush.msra.mxu0 0.0
    %863 = vmatpush.msra.mxu0 0.0
    %864 = vmatpush.msra.mxu0 %v452
    %865 = vmatpush.msra.mxu0 %v443
    %866 = vmatmul.f32.gmra.mxu0 %v730
    %v867 = vpop.f32.mrf.mxu0
    %v868 = vadd.f32 %v503, %v867
    %869 = vmatmul.f32.gmra.mxu0 %v733
    %v870 = vpop.f32.mrf.mxu0
    %v871 = vadd.f32 %v512, %v870
    %872 = vdwg.mxu0
    %873 = vmatpush.msra.mxu0 0.0
    %874 = vmatpush.msra.mxu0 0.0
    %875 = vmatpush.msra.mxu0 0.0
    %876 = vmatpush.msra.mxu0 0.0
    %877 = vmatpush.msra.mxu0 0.0
    %878 = vmatpush.msra.mxu0 0.0
    %879 = vmatpush.msra.mxu0 0.0
    %880 = vmatpush.msra.mxu0 0.0
    %881 = vmatpush.msra.mxu0 0.0
    %882 = vmatpush.msra.mxu0 0.0
    %883 = vmatpush.msra.mxu0 0.0
    %884 = vmatpush.msra.mxu0 0.0
    %885 = vmatpush.msra.mxu0 0.0
    %886 = vmatpush.msra.mxu0 0.0
    %887 = vmatpush.msra.mxu0 %v453
    %888 = vmatpush.msra.mxu0 %v444
    %889 = vmatmul.f32.gmra.mxu0 %v730
    %v890 = vpop.f32.mrf.mxu0
    %v891 = vadd.f32 %v504, %v890
    %892 = vmatmul.f32.gmra.mxu0 %v733
    %v893 = vpop.f32.mrf.mxu0
    %v894 = vadd.f32 %v513, %v893
    %895 = vdwg.mxu0
    %896 = vmatpush.msra.mxu0 0.0
    %897 = vmatpush.msra.mxu0 0.0
    %898 = vmatpush.msra.mxu0 0.0
    %899 = vmatpush.msra.mxu0 0.0
    %900 = vmatpush.msra.mxu0 0.0
    %901 = vmatpush.msra.mxu0 0.0
    %902 = vmatpush.msra.mxu0 0.0
    %903 = vmatpush.msra.mxu0 0.0
    %904 = vmatpush.msra.mxu0 0.0
    %905 = vmatpush.msra.mxu0 0.0
    %906 = vmatpush.msra.mxu0 0.0
    %907 = vmatpush.msra.mxu0 0.0
    %908 = vmatpush.msra.mxu0 0.0
    %909 = vmatpush.msra.mxu0 0.0
    %910 = vmatpush.msra.mxu0 %v454
    %911 = vmatpush.msra.mxu0 %v445
    %912 = vmatmul.f32.gmra.mxu0 %v730
    %v913 = vpop.f32.mrf.mxu0
    %v914 = vadd.f32 %v505, %v913
    %915 = vmatmul.f32.gmra.mxu0 %v733
    %v916 = vpop.f32.mrf.mxu0
    %v917 = vadd.f32 %v514, %v916
    %918 = vdwg.mxu0
    %919 = vmatpush.msra.mxu0 0.0
    %920 = vmatpush.msra.mxu0 0.0
    %921 = vmatpush.msra.mxu0 0.0
    %922 = vmatpush.msra.mxu0 0.0
    %923 = vmatpush.msra.mxu0 0.0
    %924 = vmatpush.msra.mxu0 0.0
    %925 = vmatpush.msra.mxu0 0.0
    %926 = vmatpush.msra.mxu0 0.0
    %927 = vmatpush.msra.mxu0 0.0
    %928 = vmatpush.msra.mxu0 0.0
    %929 = vmatpush.msra.mxu0 0.0
    %930 = vmatpush.msra.mxu0 0.0
    %931 = vmatpush.msra.mxu0 0.0
    %932 = vmatpush.msra.mxu0 0.0
    %933 = vmatpush.msra.mxu0 %v455
    %934 = vmatpush.msra.mxu0 %v446
    %935 = vmatmul.f32.gmra.mxu0 %v730
    %v936 = vpop.f32.mrf.mxu0
    %v937 = vadd.f32 %v506, %v936
    %938 = vmatmul.f32.gmra.mxu0 %v733
    %v939 = vpop.f32.mrf.mxu0
    %v940 = vadd.f32 %v515, %v939
    %941 = vdwg.mxu0
    %v942 = vmul.f32 %v540, %v403
    %v943 = vmul.f32 %v563, %v403
    %v944 = vmul.f32 %v586, %v403
    %v945 = vmul.f32 %v609, %v403
    %v946 = vmul.f32 %v632, %v403
    %v947 = vmul.f32 %v655, %v403
    %v948 = vmul.f32 %v678, %v403
    %v949 = vmul.f32 %v701, %v403
    %v950 = vmul.f32 %v724, %v403
    %v951 = vmul.f32 %v543, %v408
    %v952 = vmul.f32 %v566, %v408
    %v953 = vmul.f32 %v589, %v408
    %v954 = vmul.f32 %v612, %v408
    %v955 = vmul.f32 %v635, %v408
    %v956 = vmul.f32 %v658, %v408
    %v957 = vmul.f32 %v681, %v408
    %v958 = vmul.f32 %v704, %v408
    %v959 = vmul.f32 %v727, %v408
    %v960 = vmul.f32 %v753, %v413
    %v961 = vmul.f32 %v776, %v413
    %v962 = vmul.f32 %v799, %v413
    %v963 = vmul.f32 %v822, %v413
    %v964 = vmul.f32 %v845, %v413
    %v965 = vmul.f32 %v868, %v413
    %v966 = vmul.f32 %v891, %v413
    %v967 = vmul.f32 %v914, %v413
    %v968 = vmul.f32 %v937, %v413
    %v969 = vmul.f32 %v756, %v418
    %v970 = vmul.f32 %v779, %v418
    %v971 = vmul.f32 %v802, %v418
    %v972 = vmul.f32 %v825, %v418
    %v973 = vmul.f32 %v848, %v418
    %v974 = vmul.f32 %v871, %v418
    %v975 = vmul.f32 %v894, %v418
    %v976 = vmul.f32 %v917, %v418
    %v977 = vmul.f32 %v940, %v418
    %v978 = vld [vmem:[%s4] sm:$0xff]
    %v979 = vld [vmem:[%s4 + $0x8] sm:$0x1]
    %v982 = vperm.slane %v978, 0
    %v983 = vperm.slane %v978, 1
    %v984 = vperm.slane %v978, 2
    %v985 = vperm.slane %v978, 3
    %v986 = vperm.slane %v978, 4
    %v987 = vperm.slane %v978, 5
    %v988 = vperm.slane %v978, 6
    %v989 = vperm.slane %v978, 7
    %v990 = vperm.slane %v979, 0
    %v1000 = vadd.f32 %v942, %v982
    %v1001 = vadd.f32 %v943, %v983
    %v1002 = vadd.f32 %v944, %v984
    %v1003 = vadd.f32 %v945, %v985
    %v1004 = vadd.f32 %v946, %v986
    %v1005 = vadd.f32 %v947, %v987
    %v1006 = vadd.f32 %v948, %v988
    %v1007 = vadd.f32 %v949, %v989
    %v1008 = vadd.f32 %v950, %v990
    %v1009 = vadd.f32 %v951, %v982
    %v1010 = vadd.f32 %v952, %v983
    %v1011 = vadd.f32 %v953, %v984
    %v1012 = vadd.f32 %v954, %v985
    %v1013 = vadd.f32 %v955, %v986
    %v1014 = vadd.f32 %v956, %v987
    %v1015 = vadd.f32 %v957, %v988
    %v1016 = vadd.f32 %v958, %v989
    %v1017 = vadd.f32 %v959, %v990
    %v1018 = vadd.f32 %v960, %v982
    %v1019 = vadd.f32 %v961, %v983
    %v1020 = vadd.f32 %v962, %v984
    %v1021 = vadd.f32 %v963, %v985
    %v1022 = vadd.f32 %v964, %v986
    %v1023 = vadd.f32 %v965, %v987
    %v1024 = vadd.f32 %v966, %v988
    %v1025 = vadd.f32 %v967, %v989
    %v1026 = vadd.f32 %v968, %v990
    %v1027 = vadd.f32 %v969, %v982
    %v1028 = vadd.f32 %v970, %v983
    %v1029 = vadd.f32 %v971, %v984
    %v1030 = vadd.f32 %v972, %v985
    %v1031 = vadd.f32 %v973, %v986
    %v1032 = vadd.f32 %v974, %v987
    %v1033 = vadd.f32 %v975, %v988
    %v1034 = vadd.f32 %v976, %v989
    %v1035 = vadd.f32 %v977, %v990
    %1036 = vst [vmem:[#allocation6] sm:$0xff] %v1000
    %1037 = vst [vmem:[#allocation6 + $0x8] sm:$0xff] %v1009
    %1038 = vst [vmem:[#allocation6 + $0x10] sm:$0xff] %v1018
    %1039 = vst [vmem:[#allocation6 + $0x18] sm:$0xff] %v1027
    %1040 = vmatpush.xpose.msra.mxu0 0.0
    %1041 = vmatpush.xpose.msra.mxu0 0.0
    %1042 = vmatpush.xpose.msra.mxu0 0.0
    %1043 = vmatpush.xpose.msra.mxu0 0.0
    %1044 = vmatpush.xpose.msra.mxu0 0.0
    %1045 = vmatpush.xpose.msra.mxu0 0.0
    %1046 = vmatpush.xpose.msra.mxu0 0.0
    %1047 = vmatpush.xpose.msra.mxu0 0.0
    %1048 = vmatpush.xpose.msra.mxu0 0.0
    %1049 = vmatpush.xpose.msra.mxu0 0.0
    %1050 = vmatpush.xpose.msra.mxu0 0.0
    %1051 = vmatpush.xpose.msra.mxu0 0.0
    %1052 = vmatpush.xpose.msra.mxu0 0.0
    %1053 = vmatpush.xpose.msra.mxu0 0.0
    %1054 = vmatpush.xpose.msra.mxu0 %v1014
    %1055 = vmatpush.xpose.msra.mxu0 %v1005
    %1056 = vmatmul.f32.gmra.mxu0 %v1001
    %v1057 = vpop.f32.mrf.mxu0
    %v1058 = vadd.f32 0.0, %v1057
    %1059 = vmatmul.f32.gmra.mxu0 %v1010
    %v1060 = vpop.f32.mrf.mxu0
    %v1061 = vadd.f32 0.0, %v1060
    %1062 = vdwg.mxu0
    %1063 = vmatpush.xpose.msra.mxu0 0.0
    %1064 = vmatpush.xpose.msra.mxu0 0.0
    %1065 = vmatpush.xpose.msra.mxu0 0.0
    %1066 = vmatpush.xpose.msra.mxu0 0.0
    %1067 = vmatpush.xpose.msra.mxu0 0.0
    %1068 = vmatpush.xpose.msra.mxu0 0.0
    %1069 = vmatpush.xpose.msra.mxu0 0.0
    %1070 = vmatpush.xpose.msra.mxu0 0.0
    %1071 = vmatpush.xpose.msra.mxu0 0.0
    %1072 = vmatpush.xpose.msra.mxu0 0.0
    %1073 = vmatpush.xpose.msra.mxu0 0.0
    %1074 = vmatpush.xpose.msra.mxu0 0.0
    %1075 = vmatpush.xpose.msra.mxu0 0.0
    %1076 = vmatpush.xpose.msra.mxu0 0.0
    %1077 = vmatpush.xpose.msra.mxu0 %v1032
    %1078 = vmatpush.xpose.msra.mxu0 %v1023
    %1079 = vmatmul.f32.gmra.mxu0 %v1019
    %v1080 = vpop.f32.mrf.mxu0
    %v1081 = vadd.f32 0.0, %v1080
    %1082 = vmatmul.f32.gmra.mxu0 %v1028
    %v1083 = vpop.f32.mrf.mxu0
    %v1084 = vadd.f32 0.0, %v1083
    %1085 = vdwg.mxu0
    %v1086 = vtanh.pop %v1058
    %v1087 = vtanh.pop %v1061
    %v1088 = vtanh.pop %v1081
    %v1089 = vtanh.pop %v1084
    %1090 = vst.msk [vmem:[#allocation2] sm:$0xff] %vm335, %v1086
    %1091 = vst.msk [vmem:[#allocation2 + $0x8] sm:$0xff] %vm335, %v1087
    %1092 = vst.msk [vmem:[#allocation2 + $0x10] sm:$0xff] %vm335, %v1088
    %1093 = vst.msk [vmem:[#allocation2 + $0x18] sm:$0xff] %vm335, %v1089
    %1094 = vmatpush.xpose.msra.mxu0 0.0
    %1095 = vmatpush.xpose.msra.mxu0 0.0
    %1096 = vmatpush.xpose.msra.mxu0 0.0
    %1097 = vmatpush.xpose.msra.mxu0 0.0
    %1098 = vmatpush.xpose.msra.mxu0 0.0
    %1099 = vmatpush.xpose.msra.mxu0 0.0
    %1100 = vmatpush.xpose.msra.mxu0 0.0
    %1101 = vmatpush.xpose.msra.mxu0 0.0
    %1102 = vmatpush.xpose.msra.mxu0 0.0
    %1103 = vmatpush.xpose.msra.mxu0 0.0
    %1104 = vmatpush.xpose.msra.mxu0 0.0
    %1105 = vmatpush.xpose.msra.mxu0 0.0
    %1106 = vmatpush.xpose.msra.mxu0 0.0
    %1107 = vmatpush.xpose.msra.mxu0 0.0
    %1108 = vmatpush.xpose.msra.mxu0 %v1015
    %1109 = vmatpush.xpose.msra.mxu0 %v1006
    %1110 = vmatmul.f32.gmra.mxu0 %v1002
    %v1111 = vpop.f32.mrf.mxu0
    %v1112 = vadd.f32 0.0, %v1111
    %1113 = vmatmul.f32.gmra.mxu0 %v1011
    %v1114 = vpop.f32.mrf.mxu0
    %v1115 = vadd.f32 0.0, %v1114
    %1116 = vdwg.mxu0
    %1117 = vmatpush.xpose.msra.mxu0 0.0
    %1118 = vmatpush.xpose.msra.mxu0 0.0
    %1119 = vmatpush.xpose.msra.mxu0 0.0
    %1120 = vmatpush.xpose.msra.mxu0 0.0
    %1121 = vmatpush.xpose.msra.mxu0 0.0
    %1122 = vmatpush.xpose.msra.mxu0 0.0
    %1123 = vmatpush.xpose.msra.mxu0 0.0
    %1124 = vmatpush.xpose.msra.mxu0 0.0
    %1125 = vmatpush.xpose.msra.mxu0 0.0
    %1126 = vmatpush.xpose.msra.mxu0 0.0
    %1127 = vmatpush.xpose.msra.mxu0 0.0
    %1128 = vmatpush.xpose.msra.mxu0 0.0
    %1129 = vmatpush.xpose.msra.mxu0 0.0
    %1130 = vmatpush.xpose.msra.mxu0 0.0
    %1131 = vmatpush.xpose.msra.mxu0 %v1033
    %1132 = vmatpush.xpose.msra.mxu0 %v1024
    %1133 = vmatmul.f32.gmra.mxu0 %v1020
    %v1134 = vpop.f32.mrf.mxu0
    %v1135 = vadd.f32 0.0, %v1134
    %1136 = vmatmul.f32.gmra.mxu0 %v1029
    %v1137 = vpop.f32.mrf.mxu0
    %v1138 = vadd.f32 0.0, %v1137
    %1139 = vdwg.mxu0
    %v1140 = vtanh.pop %v1112
    %v1141 = vtanh.pop %v1115
    %v1142 = vtanh.pop %v1135
    %v1143 = vtanh.pop %v1138
    %v1144 = vld [vmem:[#allocation2] sm:$0xff]
    %v1145 = vld [vmem:[#allocation2 + $0x8] sm:$0xff]
    %v1146 = vld [vmem:[#allocation2 + $0x10] sm:$0xff]
    %v1147 = vld [vmem:[#allocation2 + $0x18] sm:$0xff]
    %v1148 = vadd.f32 %v1144, %v1140
    %v1149 = vadd.f32 %v1145, %v1141
    %v1150 = vadd.f32 %v1146, %v1142
    %v1151 = vadd.f32 %v1147, %v1143
    %1152 = vst.msk [vmem:[#allocation2] sm:$0xff] %vm335, %v1148
    %1153 = vst.msk [vmem:[#allocation2 + $0x8] sm:$0xff] %vm335, %v1149
    %1154 = vst.msk [vmem:[#allocation2 + $0x10] sm:$0xff] %vm335, %v1150
    %1155 = vst.msk [vmem:[#allocation2 + $0x18] sm:$0xff] %vm335, %v1151
    %1156 = vmatpush.xpose.msra.mxu0 0.0
    %1157 = vmatpush.xpose.msra.mxu0 0.0
    %1158 = vmatpush.xpose.msra.mxu0 0.0
    %1159 = vmatpush.xpose.msra.mxu0 0.0
    %1160 = vmatpush.xpose.msra.mxu0 0.0
    %1161 = vmatpush.xpose.msra.mxu0 0.0
    %1162 = vmatpush.xpose.msra.mxu0 0.0
    %1163 = vmatpush.xpose.msra.mxu0 0.0
    %1164 = vmatpush.xpose.msra.mxu0 0.0
    %1165 = vmatpush.xpose.msra.mxu0 0.0
    %1166 = vmatpush.xpose.msra.mxu0 0.0
    %1167 = vmatpush.xpose.msra.mxu0 0.0
    %1168 = vmatpush.xpose.msra.mxu0 0.0
    %1169 = vmatpush.xpose.msra.mxu0 0.0
    %1170 = vmatpush.xpose.msra.mxu0 %v1016
    %1171 = vmatpush.xpose.msra.mxu0 %v1007
    %1172 = vmatmul.f32.gmra.mxu0 %v1003
    %v1173 = vpop.f32.mrf.mxu0
    %v1174 = vadd.f32 0.0, %v1173
    %1175 = vmatmul.f32.gmra.mxu0 %v1012
    %v1176 = vpop.f32.mrf.mxu0
    %v1177 = vadd.f32 0.0, %v1176
    %1178 = vdwg.mxu0
    %1179 = vmatpush.xpose.msra.mxu0 0.0
    %1180 = vmatpush.xpose.msra.mxu0 0.0
    %1181 = vmatpush.xpose.msra.mxu0 0.0
    %1182 = vmatpush.xpose.msra.mxu0 0.0
    %1183 = vmatpush.xpose.msra.mxu0 0.0
    %1184 = vmatpush.xpose.msra.mxu0 0.0
    %1185 = vmatpush.xpose.msra.mxu0 0.0
    %1186 = vmatpush.xpose.msra.mxu0 0.0
    %1187 = vmatpush.xpose.msra.mxu0 0.0
    %1188 = vmatpush.xpose.msra.mxu0 0.0
    %1189 = vmatpush.xpose.msra.mxu0 0.0
    %1190 = vmatpush.xpose.msra.mxu0 0.0
    %1191 = vmatpush.xpose.msra.mxu0 0.0
    %1192 = vmatpush.xpose.msra.mxu0 0.0
    %1193 = vmatpush.xpose.msra.mxu0 %v1034
    %1194 = vmatpush.xpose.msra.mxu0 %v1025
    %1195 = vmatmul.f32.gmra.mxu0 %v1021
    %v1196 = vpop.f32.mrf.mxu0
    %v1197 = vadd.f32 0.0, %v1196
    %1198 = vmatmul.f32.gmra.mxu0 %v1030
    %v1199 = vpop.f32.mrf.mxu0
    %v1200 = vadd.f32 0.0, %v1199
    %1201 = vdwg.mxu0
    %v1202 = vtanh.pop %v1174
    %v1203 = vtanh.pop %v1177
    %v1204 = vtanh.pop %v1197
    %v1205 = vtanh.pop %v1200
    %v1206 = vld [vmem:[#allocation2] sm:$0xff]
    %v1207 = vld [vmem:[#allocation2 + $0x8] sm:$0xff]
    %v1208 = vld [vmem:[#allocation2 + $0x10] sm:$0xff]
    %v1209 = vld [vmem:[#allocation2 + $0x18] sm:$0xff]
    %v1210 = vadd.f32 %v1206, %v1202
    %v1211 = vadd.f32 %v1207, %v1203
    %v1212 = vadd.f32 %v1208, %v1204
    %v1213 = vadd.f32 %v1209, %v1205
    %1214 = vst.msk [vmem:[#allocation2] sm:$0xff] %vm335, %v1210
    %1215 = vst.msk [vmem:[#allocation2 + $0x8] sm:$0xff] %vm335, %v1211
    %1216 = vst.msk [vmem:[#allocation2 + $0x10] sm:$0xff] %vm335, %v1212
    %1217 = vst.msk [vmem:[#allocation2 + $0x18] sm:$0xff] %vm335, %v1213
    %1218 = vmatpush.xpose.msra.mxu0 0.0
    %1219 = vmatpush.xpose.msra.mxu0 0.0
    %1220 = vmatpush.xpose.msra.mxu0 0.0
    %1221 = vmatpush.xpose.msra.mxu0 0.0
    %1222 = vmatpush.xpose.msra.mxu0 0.0
    %1223 = vmatpush.xpose.msra.mxu0 0.0
    %1224 = vmatpush.xpose.msra.mxu0 0.0
    %1225 = vmatpush.xpose.msra.mxu0 0.0
    %1226 = vmatpush.xpose.msra.mxu0 0.0
    %1227 = vmatpush.xpose.msra.mxu0 0.0
    %1228 = vmatpush.xpose.msra.mxu0 0.0
    %1229 = vmatpush.xpose.msra.mxu0 0.0
    %1230 = vmatpush.xpose.msra.mxu0 0.0
    %1231 = vmatpush.xpose.msra.mxu0 0.0
    %1232 = vmatpush.xpose.msra.mxu0 %v1017
    %1233 = vmatpush.xpose.msra.mxu0 %v1008
    %1234 = vmatmul.f32.gmra.mxu0 %v1004
    %v1235 = vpop.f32.mrf.mxu0
    %v1236 = vadd.f32 0.0, %v1235
    %1237 = vmatmul.f32.gmra.mxu0 %v1013
    %v1238 = vpop.f32.mrf.mxu0
    %v1239 = vadd.f32 0.0, %v1238
    %1240 = vdwg.mxu0
    %1241 = vmatpush.xpose.msra.mxu0 0.0
    %1242 = vmatpush.xpose.msra.mxu0 0.0
    %1243 = vmatpush.xpose.msra.mxu0 0.0
    %1244 = vmatpush.xpose.msra.mxu0 0.0
    %1245 = vmatpush.xpose.msra.mxu0 0.0
    %1246 = vmatpush.xpose.msra.mxu0 0.0
    %1247 = vmatpush.xpose.msra.mxu0 0.0
    %1248 = vmatpush.xpose.msra.mxu0 0.0
    %1249 = vmatpush.xpose.msra.mxu0 0.0
    %1250 = vmatpush.xpose.msra.mxu0 0.0
    %1251 = vmatpush.xpose.msra.mxu0 0.0
    %1252 = vmatpush.xpose.msra.mxu0 0.0
    %1253 = vmatpush.xpose.msra.mxu0 0.0
    %1254 = vmatpush.xpose.msra.mxu0 0.0
    %1255 = vmatpush.xpose.msra.mxu0 %v1035
    %1256 = vmatpush.xpose.msra.mxu0 %v1026
    %1257 = vmatmul.f32.gmra.mxu0 %v1022
    %v1258 = vpop.f32.mrf.mxu0
    %v1259 = vadd.f32 0.0, %v1258
    %1260 = vmatmul.f32.gmra.mxu0 %v1031
    %v1261 = vpop.f32.mrf.mxu0
    %v1262 = vadd.f32 0.0, %v1261
    %1263 = vdwg.mxu0
    %v1264 = vtanh.pop %v1236
    %v1265 = vtanh.pop %v1239
    %v1266 = vtanh.pop %v1259
    %v1267 = vtanh.pop %v1262
    %v1268 = vld [vmem:[#allocation2] sm:$0xff]
    %v1269 = vld [vmem:[#allocation2 + $0x8] sm:$0xff]
    %v1270 = vld [vmem:[#allocation2 + $0x10] sm:$0xff]
    %v1271 = vld [vmem:[#allocation2 + $0x18] sm:$0xff]
    %v1272 = vadd.f32 %v1268, %v1264
    %v1273 = vadd.f32 %v1269, %v1265
    %v1274 = vadd.f32 %v1270, %v1266
    %v1275 = vadd.f32 %v1271, %v1267
    %1276 = vst.msk [vmem:[#allocation2] sm:$0xff] %vm335, %v1272
    %1277 = vst.msk [vmem:[#allocation2 + $0x8] sm:$0xff] %vm335, %v1273
    %1278 = vst.msk [vmem:[#allocation2 + $0x10] sm:$0xff] %vm335, %v1274
    %1279 = vst.msk [vmem:[#allocation2 + $0x18] sm:$0xff] %vm335, %v1275
    %v1280 = vld [vmem:[#allocation2] sm:$0xff]
    %v1281 = vld [vmem:[#allocation2 + $0x8] sm:$0xff]
    %1282 = vxpose.xlu0.b32.start [1/16] %v1280, 128
    %1283 = vxpose.xlu0.b32.cont [2/16] %v1281, 128
    %1284 = vxpose.xlu0.b32.cont [3/16] 0.0, 128
    %1285 = vxpose.xlu0.b32.cont [4/16] 0.0, 128
    %1286 = vxpose.xlu0.b32.cont [5/16] 0.0, 128
    %1287 = vxpose.xlu0.b32.cont [6/16] 0.0, 128
    %1288 = vxpose.xlu0.b32.cont [7/16] 0.0, 128
    %1289 = vxpose.xlu0.b32.cont [8/16] 0.0, 128
    %1290 = vxpose.xlu0.b32.cont [9/16] 0.0, 128
    %1291 = vxpose.xlu0.b32.cont [10/16] 0.0, 128
    %1292 = vxpose.xlu0.b32.cont [11/16] 0.0, 128
    %1293 = vxpose.xlu0.b32.cont [12/16] 0.0, 128
    %1294 = vxpose.xlu0.b32.cont [13/16] 0.0, 128
    %1295 = vxpose.xlu0.b32.cont [14/16] 0.0, 128
    %1296 = vxpose.xlu0.b32.cont [15/16] 0.0, 128
    %1297 = vxpose.xlu0.b32.end [16/16] 0.0, 128
    %v1298 = vpop.trf.xlu0
    %v1299 = vpop.trf.xlu0
    %v1300 = vpop.trf.xlu0
    %v1301 = vpop.trf.xlu0
    %v1302 = vpop.trf.xlu0
    %v1303 = vpop.trf.xlu0
    %v1304 = vpop.trf.xlu0
    %v1305 = vpop.trf.xlu0
    %v1306 = vpop.trf.xlu0
    %v1307 = vpop.trf.xlu0
    %v1308 = vpop.trf.xlu0
    %v1309 = vpop.trf.xlu0
    %v1310 = vpop.trf.xlu0
    %v1311 = vpop.trf.xlu0
    %v1312 = vpop.trf.xlu0
    %v1313 = vpop.trf.xlu0
    %v1314 = vadd.f32 %v1280, %v1298
    %v1315 = vadd.f32 %v1281, %v1299
    %v1316 = vmul.f32 %v1314, 0.125
    %v1317 = vmul.f32 %v1315, 0.125
    %1318 = vst.msk [vmem:[#allocation7] sm:$0xff] %vm335, %v1316
    %1319 = vst.msk [vmem:[#allocation7 + $0x8] sm:$0xff] %vm335, %v1317
    %s1320 = scalar_lea.vmem [#allocation2], 16
    %v1321 = vld [vmem:[%s1320] sm:$0xff]
    %v1322 = vld [vmem:[%s1320 + $0x8] sm:$0xff]
    %1323 = vxpose.xlu0.b32.start [1/16] %v1321, 128
    %1324 = vxpose.xlu0.b32.cont [2/16] %v1322, 128
    %1325 = vxpose.xlu0.b32.cont [3/16] 0.0, 128
    %1326 = vxpose.xlu0.b32.cont [4/16] 0.0, 128
    %1327 = vxpose.xlu0.b32.cont [5/16] 0.0, 128
    %1328 = vxpose.xlu0.b32.cont [6/16] 0.0, 128
    %1329 = vxpose.xlu0.b32.cont [7/16] 0.0, 128
    %1330 = vxpose.xlu0.b32.cont [8/16] 0.0, 128
    %1331 = vxpose.xlu0.b32.cont [9/16] 0.0, 128
    %1332 = vxpose.xlu0.b32.cont [10/16] 0.0, 128
    %1333 = vxpose.xlu0.b32.cont [11/16] 0.0, 128
    %1334 = vxpose.xlu0.b32.cont [12/16] 0.0, 128
    %1335 = vxpose.xlu0.b32.cont [13/16] 0.0, 128
    %1336 = vxpose.xlu0.b32.cont [14/16] 0.0, 128
    %1337 = vxpose.xlu0.b32.cont [15/16] 0.0, 128
    %1338 = vxpose.xlu0.b32.end [16/16] 0.0, 128
    %v1339 = vpop.trf.xlu0
    %v1340 = vpop.trf.xlu0
    %v1341 = vpop.trf.xlu0
    %v1342 = vpop.trf.xlu0
    %v1343 = vpop.trf.xlu0
    %v1344 = vpop.trf.xlu0
    %v1345 = vpop.trf.xlu0
    %v1346 = vpop.trf.xlu0
    %v1347 = vpop.trf.xlu0
    %v1348 = vpop.trf.xlu0
    %v1349 = vpop.trf.xlu0
    %v1350 = vpop.trf.xlu0
    %v1351 = vpop.trf.xlu0
    %v1352 = vpop.trf.xlu0
    %v1353 = vpop.trf.xlu0
    %v1354 = vpop.trf.xlu0
    %v1355 = vadd.f32 %v1321, %v1339
    %v1356 = vadd.f32 %v1322, %v1340
    %v1357 = vmul.f32 %v1355, 0.125
    %v1358 = vmul.f32 %v1356, 0.125
    %s1359 = scalar_lea.vmem [#allocation7], 16
    %1360 = vst.msk [vmem:[%s1359] sm:$0xff] %vm335, %v1357
    %1361 = vst.msk [vmem:[%s1359 + $0x8] sm:$0xff] %vm335, %v1358
    // Predicated region
    $region26: #{tpu_custom_call.1} parent=1 // pred_check
      _
    $region27: #{tpu_custom_call.1} parent=1 // pred_check_branch
      %1363 = sbr.rel (0) target = $region29
    $region28: #{tpu_custom_call.1} parent=1 // pred_region
      %1365 = vsyncadd [#allocation5], 0
      %s1366 = sshll.u32 [#allocation6], 4
      %s1367 = int_to_ptr.vmem [resolvable:$true] %s1366
      %s1368 = sshll.u32 %s5, 4
      %s1369 = int_to_ptr.hbm [resolvable:$true] %s1368
      %1374 = dma.vmem_to_hbm [thread:$0]  %s1367, 512, %s1369, [#allocation5], 128, 128, 8
    $region29: #{tpu_custom_call.1} parent=1 // pred_fallthru
      _
    // Predicated region
    $region30: #{tpu_custom_call.1} parent=1 // pred_check
      _
    $region31: #{tpu_custom_call.1} parent=1 // pred_check_branch
      %1376 = sbr.rel (0) target = $region33
    $region32: #{tpu_custom_call.1} parent=1 // pred_region
      %1378 = vsyncadd [#allocation8], 0
      %s1379 = sshll.u32 [#allocation7], 4
      %s1380 = int_to_ptr.vmem [resolvable:$true] %s1379
      %s1381 = sshll.u32 %s6, 4
      %s1382 = int_to_ptr.hbm [resolvable:$true] %s1381
      %1387 = dma.vmem_to_hbm [thread:$0]  %s1380, 512, %s1382, [#allocation8], 128, 128, 8
    $region33: #{tpu_custom_call.1} parent=1 // pred_fallthru
      _
    // Predicated region
    $region34: #{tpu_custom_call.1} parent=1 // pred_check
      _
    $region35: #{tpu_custom_call.1} parent=1 // pred_check_branch
      %1389 = sbr.rel (0) target = $region37
    $region36: #{tpu_custom_call.1} parent=1 // pred_region
      %1391 = dma.done [#allocation5], 512
    $region37: #{tpu_custom_call.1} parent=1 // pred_fallthru
      _
    // Predicated region
    $region38: #{tpu_custom_call.1} parent=1 // pred_check
      _
    $region39: #{tpu_custom_call.1} parent=1 // pred_check_branch
      %1393 = sbr.rel (0) target = $region41
    $region40: #{tpu_custom_call.1} parent=1 // pred_region
      %1395 = dma.done [#allocation8], 512
    $region41: #{tpu_custom_call.1} parent=1 // pred_fallthru
      _
    %1396 = vsyncpa [#allocation4], 1
    %1397 = vsyncpa [#allocation5], 1
    %1398 = vsyncpa [#allocation8], 1

</llo_original>
